<compile_context>
chip_gen: v7x
topology: tpu7x:2x2x1
jax: 0.10.0
libtpu: 0.0.40
codegen_flags: <defaults>
</compile_context>

<pallas_src>
import functools

import jax
import jax.numpy as jnp
from jax import lax
from jax.experimental import pallas as pl
from jax.experimental.pallas import tpu as pltpu

ALPHA_ECHO = 0.5    # leak rate of the echo (reservoir) cell
ALPHA_DM = 0.25     # leak rate of the decision-making readout cell


def _round_up(x, m):
    return (x + m - 1) // m * m


def _pad_to(a, shape):
    pads = [(0, t - s) for s, t in zip(a.shape, shape)]
    return jnp.pad(a, pads)


# ---------------------------------------------------------------------------
# Kernel: one grid step processes TT timesteps.  Weights use constant
# index_maps (DMA'd once, resident in VMEM); the recurrent state (u, h, s) is
# carried in revisited constant-index output blocks, initialized from the
# aliased state inputs at grid step 0.
# ---------------------------------------------------------------------------
def _dm_echo1_block_kernel(xproj_ref, u0_ref, h0_ref, s0_ref,
                           w_rec_ref, w_out_ref, b_dm_ref,
                           r_ref, u_ref, h_ref, s_ref,
                           *, tt, t_total):
    blk = pl.program_id(0)

    @pl.when(blk == 0)
    def _():
        u_ref[...] = u0_ref[...]
        h_ref[...] = h0_ref[...]
        s_ref[...] = s0_ref[...]

    # Resident weights (loaded once per grid step, outside the time loop).
    w_rec = w_rec_ref[...]          # [Ep, Ep]  pre-scaled by ALPHA_ECHO
    w_out = w_out_ref[...]          # [Ep, Dp]  pre-scaled by ALPHA_DM
    b_dm = b_dm_ref[...]            # [1, Dp]   pre-scaled by ALPHA_DM

    one_m_ae = 1.0 - ALPHA_ECHO
    one_m_ad = 1.0 - ALPHA_DM
    need_mask = (t_total % tt) != 0   # static: only mask if T was padded up

    def step(i, carry):
        u, h, s = carry
        xp = xproj_ref[i]                                      # [Bp, Ep]
        u_new = one_m_ae * u + (
            jnp.dot(h, w_rec, preferred_element_type=jnp.float32) + xp)
        h_new = jnp.tanh(u_new)
        s_new = one_m_ad * s + (
            jnp.dot(h_new, w_out, preferred_element_type=jnp.float32) + b_dm)
        r_new = jnp.tanh(s_new)
        if need_mask:
            valid = (blk * tt + i) < t_total
            u_new = jnp.where(valid, u_new, u)
            h_new = jnp.where(valid, h_new, h)
            s_new = jnp.where(valid, s_new, s)
        r_ref[i] = r_new
        return (u_new, h_new, s_new)

    carry = (u_ref[...], h_ref[...], s_ref[...])
    if tt <= 16:
        # Short fixed trip count: unroll at trace time.
        for i in range(tt):
            carry = step(i, carry)
    else:
        carry = lax.fori_loop(0, tt, step, carry)

    u, h, s = carry
    u_ref[...] = u
    h_ref[...] = h
    s_ref[...] = s


# ---------------------------------------------------------------------------
# Jitted implementation: hoisted input projection + blocked sequence kernel.
# ---------------------------------------------------------------------------
@functools.partial(jax.jit, static_argnames=("n_echo", "n_dm", "tt"))
def _dm_echo1_seq_impl(x_seq, u0, h0, s0, w_in, b_echo,
                       w_rec_p, w_out_p, b_dm_p, *, n_echo, n_dm, tt):
    T, B, _ = x_seq.shape
    Bp = _round_up(B, 8)
    Ep = w_rec_p.shape[0]
    Dp = w_out_p.shape[1]
    n_blk = -(-T // tt)
    Tp = n_blk * tt

    # Non-recurrent input projection hoisted off the serial critical path:
    # one batched [T*B, n_inp] x [n_inp, n_echo] matmul (plain XLA), with the
    # echo leak rate and bias folded in.
    xproj = ALPHA_ECHO * (
        jnp.einsum("tbi,ie->tbe", x_seq.astype(jnp.float32), w_in) + b_echo)
    xproj_p = _pad_to(xproj, (Tp, Bp, Ep))

    u_p = _pad_to(u0.astype(jnp.float32), (Bp, Ep))
    h_p = _pad_to(h0.astype(jnp.float32), (Bp, Ep))
    s_p = _pad_to(s0.astype(jnp.float32), (Bp, Dp))

    def const(shape):
        # Full-array block, constant index_map -> resident in VMEM.
        return pl.BlockSpec(shape, lambda t: (0,) * len(shape))

    out_shapes = (
        jax.ShapeDtypeStruct((Tp, Bp, Dp), jnp.float32),   # r sequence
        jax.ShapeDtypeStruct((Bp, Ep), jnp.float32),       # u_echo (final)
        jax.ShapeDtypeStruct((Bp, Ep), jnp.float32),       # h_echo (final)
        jax.ShapeDtypeStruct((Bp, Dp), jnp.float32),       # s_dm   (final)
    )

    # Explicit VMEM budget (weights + state carries + double-buffered slabs).
    est_vmem = 4 * (2 * tt * Bp * (Ep + Dp)        # xproj + r slabs (2 bufs)
                    + 2 * (Ep * Ep + Ep * Dp + Dp) # resident weights/bias
                    + 4 * (2 * Bp * Ep + Bp * Dp)) # u/h/s in + out blocks
    vmem_limit = int(min(max(2 * est_vmem, 32 * 1024 * 1024),
                         120 * 1024 * 1024))

    kernel = functools.partial(_dm_echo1_block_kernel, tt=tt, t_total=T)

    r_p, u_new_p, h_new_p, s_new_p = pl.pallas_call(
        kernel,
        out_shape=out_shapes,
        grid=(n_blk,),
        in_specs=[
            pl.BlockSpec((tt, Bp, Ep), lambda t: (t, 0, 0)),   # xproj slab
            const((Bp, Ep)),            # u0
            const((Bp, Ep)),            # h0
            const((Bp, Dp)),            # s0
            const((Ep, Ep)),            # ALPHA_ECHO * W_rec (padded)
            const((Ep, Dp)),            # ALPHA_DM * W_out   (padded)
            const((1, Dp)),             # ALPHA_DM * b_dm    (padded)
        ],
        out_specs=[
            pl.BlockSpec((tt, Bp, Dp), lambda t: (t, 0, 0)),   # r slab
            const((Bp, Ep)),            # u carry / final
            const((Bp, Ep)),            # h carry / final
            const((Bp, Dp)),            # s carry / final
        ],
        # State updates in place: u0 -> u_out, h0 -> h_out, s0 -> s_out.
        input_output_aliases={1: 1, 2: 2, 3: 3},
        compiler_params=pltpu.CompilerParams(
            dimension_semantics=("arbitrary",),
            vmem_limit_bytes=vmem_limit),
    )(xproj_p, u_p, h_p, s_p, w_rec_p, w_out_p, b_dm_p)

    r_seq = r_p[:T, :B, :n_dm]
    return r_seq, (u_new_p[:B, :n_echo],
                   h_new_p[:B, :n_echo],
                   s_new_p[:B, :n_dm])


# ---------------------------------------------------------------------------
# Parameter prep (padding / leak-rate folding done ONCE, reused across calls)
# and public wrappers.
# ---------------------------------------------------------------------------
def prepare_params(params):
    """Pad + fold leak rates into the weights once, outside the forward."""
    w_in, w_rec, b_echo, w_out, b_dm = params
    n_echo = w_rec.shape[0]
    n_dm = w_out.shape[1]
    Ep = _round_up(n_echo, 128)
    Dp = _round_up(n_dm, 128)
    # Keep f32 for tight validation tolerances; cast w_rec_p/w_out_p to
    # jnp.bfloat16 here for MXU-native weights on v6e/v7x if acceptable.
    return dict(
        w_in=jnp.asarray(w_in, jnp.float32),
        b_echo=jnp.asarray(b_echo, jnp.float32),
        w_rec_p=_pad_to(jnp.asarray(w_rec, jnp.float32) * ALPHA_ECHO, (Ep, Ep)),
        w_out_p=_pad_to(jnp.asarray(w_out, jnp.float32) * ALPHA_DM, (Ep, Dp)),
        b_dm_p=_pad_to(jnp.asarray(b_dm, jnp.float32) * ALPHA_DM, (1, Dp)),
        n_echo=int(n_echo),
        n_dm=int(n_dm),
    )


def dm_echo1_forward_seq(x_seq, hid, prep, *, tt=None):
    """Run dm_echo1.forward (y=None branch) over x_seq: [T, B, n_inp].

    Returns (r_seq [T, B, n_dm], (u_echo, h_echo, s_dm)) with states after the
    last timestep.  `prep` comes from prepare_params(params)."""
    u0, h0, s0 = hid
    T = x_seq.shape[0]
    if tt is None:
        tt = min(T, 32)          # timesteps per grid step
    return _dm_echo1_seq_impl(
        x_seq, u0, h0, s0,
        prep["w_in"], prep["b_echo"],
        prep["w_rec_p"], prep["w_out_p"], prep["b_dm_p"],
        n_echo=prep["n_echo"], n_dm=prep["n_dm"], tt=int(tt))


def dm_echo1_forward(x, hid, prep):
    """Single-step forward, exactly matching dm_echo1.forward(x, hid) (y=None)."""
    r_seq, hid_new = dm_echo1_forward_seq(x[None], hid, prep, tt=1)
    return r_seq[0], hid_new


# ---------------------------------------------------------------------------
# Pure-JAX references for validation.
# ---------------------------------------------------------------------------
def dm_echo1_reference(x, hid, params):
    u_echo, h_echo, s_dm = hid
    w_in, w_rec, b_echo, w_out, b_dm = params
    pre_echo = x @ w_in + h_echo @ w_rec + b_echo
    u_new = (1.0 - ALPHA_ECHO) * u_echo + ALPHA_ECHO * pre_echo
    h_new = jnp.tanh(u_new)
    pre_dm = h_new @ w_out + b_dm
    s_new = (1.0 - ALPHA_DM) * s_dm + ALPHA_DM * pre_dm
    r_new = jnp.tanh(s_new)
    return r_new, (u_new, h_new, s_new)


def dm_echo1_reference_seq(x_seq, hid, params):
    def step(carry, x):
        r, new_hid = dm_echo1_reference(x, carry, params)
        return new_hid, r
    hid_final, r_seq = lax.scan(step, hid, x_seq)
    return r_seq, hid_final


def init_params(key, n_inp, n_echo, n_dm):
    """Deterministic synthetic parameter init (shapes per module __init__)."""
    k1, k2, k3 = jax.random.split(key, 3)
    w_in = jax.random.normal(k1, (n_inp, n_echo), jnp.float32) / jnp.sqrt(n_inp)
    w_rec = (jax.random.normal(k2, (n_echo, n_echo), jnp.float32)
             * (0.9 / jnp.sqrt(n_echo)))          # spectral-radius-ish scaling
    b_echo = jnp.zeros((1, n_echo), jnp.float32)
    w_out = jax.random.normal(k3, (n_echo, n_dm), jnp.float32) / jnp.sqrt(n_echo)
    b_dm = jnp.zeros((1, n_dm), jnp.float32)
    return w_in, w_rec, b_echo, w_out, b_dm


if __name__ == "__main__":
    T, B, n_inp, n_echo, n_dm = 8, 4, 16, 128, 32

    key = jax.random.PRNGKey(0)
    kx, ku, ks, kp = jax.random.split(key, 4)

    x_seq = jax.random.normal(kx, (T, B, n_inp), jnp.float32)
    u_echo = jax.random.normal(ku, (B, n_echo), jnp.float32) * 0.1
    h_echo = jnp.tanh(u_echo)
    s_dm = jax.random.normal(ks, (B, n_dm), jnp.float32) * 0.1
    hid0 = (u_echo, h_echo, s_dm)
    params = init_params(kp, n_inp, n_echo, n_dm)
    prep = prepare_params(params)

    # Fused sequence kernel (all T timesteps, one pallas_call, TT-blocked).
    r_seq, (u_f, h_f, s_f) = dm_echo1_forward_seq(x_seq, hid0, prep)
    jax.block_until_ready((r_seq, u_f, h_f, s_f))

    r_ref, (u_ref, h_ref, s_ref) = dm_echo1_reference_seq(x_seq, hid0, params)
    assert jnp.allclose(r_seq, r_ref, atol=1e-4, rtol=1e-4)
    assert jnp.allclose(u_f, u_ref, atol=1e-4, rtol=1e-4)
    assert jnp.allclose(h_f, h_ref, atol=1e-4, rtol=1e-4)
    assert jnp.allclose(s_f, s_ref, atol=1e-4, rtol=1e-4)

    # Single-step API (exact module.forward semantics).
    r1, (u1, h1, s1) = dm_echo1_forward(x_seq[0], hid0, prep)
    jax.block_until_ready((r1, u1, h1, s1))
    r1_ref, (u1_ref, h1_ref, s1_ref) = dm_echo1_reference(x_seq[0], hid0, params)
    assert jnp.allclose(r1, r1_ref, atol=1e-4, rtol=1e-4)
    assert jnp.allclose(u1, u1_ref, atol=1e-4, rtol=1e-4)
    assert jnp.allclose(h1, h1_ref, atol=1e-4, rtol=1e-4)
    assert jnp.allclose(s1, s1_ref, atol=1e-4, rtol=1e-4)

    print("KERNEL_OK")
</pallas_src>

<mosaic_0001>
module attributes {stable_mosaic.version = 11 : i64} {
  func.func @_dm_echo1_block_kernel(%arg0: i32, %arg1: memref<8x8x128xf32, #tpu.memory_space<vmem>>, %arg2: memref<8x128xf32, #tpu.memory_space<vmem>>, %arg3: memref<8x128xf32, #tpu.memory_space<vmem>>, %arg4: memref<8x128xf32, #tpu.memory_space<vmem>>, %arg5: memref<128x128xf32, #tpu.memory_space<vmem>>, %arg6: memref<128x128xf32, #tpu.memory_space<vmem>>, %arg7: memref<1x128xf32, #tpu.memory_space<vmem>>, %arg8: memref<8x8x128xf32, #tpu.memory_space<vmem>>, %arg9: memref<8x128xf32, #tpu.memory_space<vmem>>, %arg10: memref<8x128xf32, #tpu.memory_space<vmem>>, %arg11: memref<8x128xf32, #tpu.memory_space<vmem>>) attributes {dimension_semantics = [#tpu.dimension_semantics<arbitrary>], iteration_bounds = array<i64: 1>, scalar_prefetch = 0 : i64, scratch_operands = 0 : i64, tpu.core_type = #tpu.core_type<tc>, window_params = [{transform_indices = @transform_0, window_bounds = array<i64: 8, 8, 128>}, {pipeline_mode = #tpu.pipeline_mode<synchronous>, transform_indices = @transform_1, window_bounds = array<i64: 8, 128>}, {pipeline_mode = #tpu.pipeline_mode<synchronous>, transform_indices = @transform_2, window_bounds = array<i64: 8, 128>}, {pipeline_mode = #tpu.pipeline_mode<synchronous>, transform_indices = @transform_3, window_bounds = array<i64: 8, 128>}, {pipeline_mode = #tpu.pipeline_mode<synchronous>, transform_indices = @transform_4, window_bounds = array<i64: 128, 128>}, {pipeline_mode = #tpu.pipeline_mode<synchronous>, transform_indices = @transform_5, window_bounds = array<i64: 128, 128>}, {pipeline_mode = #tpu.pipeline_mode<synchronous>, transform_indices = @transform_6, window_bounds = array<i64: 1, 128>}, {transform_indices = @transform_7, window_bounds = array<i64: 8, 8, 128>}, {pipeline_mode = #tpu.pipeline_mode<synchronous>, transform_indices = @transform_8, window_bounds = array<i64: 8, 128>}, {pipeline_mode = #tpu.pipeline_mode<synchronous>, transform_indices = @transform_9, window_bounds = array<i64: 8, 128>}, {pipeline_mode = #tpu.pipeline_mode<synchronous>, transform_indices = @transform_10, window_bounds = array<i64: 8, 128>}]} {
    %c0_i32 = arith.constant 0 : i32
    %0 = arith.cmpi eq, %arg0, %c0_i32 : i32
    %1 = arith.extui %0 : i1 to i32
    %c0_i32_0 = arith.constant 0 : i32
    %2 = arith.cmpi ne, %1, %c0_i32_0 : i32
    scf.if %2 {
      %c0_90 = arith.constant 0 : index
      %c0_91 = arith.constant 0 : index
      %156 = vector.load %arg2[%c0_90, %c0_91] : memref<8x128xf32, #tpu.memory_space<vmem>>, vector<8x128xf32>
      %c0_92 = arith.constant 0 : index
      %c0_93 = arith.constant 0 : index
      %157 = vector.load %arg9[%c0_92, %c0_93] : memref<8x128xf32, #tpu.memory_space<vmem>>, vector<8x128xf32>
      tpu.vector_store %arg9[%c0_92, %c0_93], %156 {strides = array<i32>} : memref<8x128xf32, #tpu.memory_space<vmem>>, vector<8x128xf32>,
      %c0_94 = arith.constant 0 : index
      %c0_95 = arith.constant 0 : index
      %158 = vector.load %arg3[%c0_94, %c0_95] : memref<8x128xf32, #tpu.memory_space<vmem>>, vector<8x128xf32>
      %c0_96 = arith.constant 0 : index
      %c0_97 = arith.constant 0 : index
      %159 = vector.load %arg10[%c0_96, %c0_97] : memref<8x128xf32, #tpu.memory_space<vmem>>, vector<8x128xf32>
      tpu.vector_store %arg10[%c0_96, %c0_97], %158 {strides = array<i32>} : memref<8x128xf32, #tpu.memory_space<vmem>>, vector<8x128xf32>,
      %c0_98 = arith.constant 0 : index
      %c0_99 = arith.constant 0 : index
      %160 = vector.load %arg4[%c0_98, %c0_99] : memref<8x128xf32, #tpu.memory_space<vmem>>, vector<8x128xf32>
      %c0_100 = arith.constant 0 : index
      %c0_101 = arith.constant 0 : index
      %161 = vector.load %arg11[%c0_100, %c0_101] : memref<8x128xf32, #tpu.memory_space<vmem>>, vector<8x128xf32>
      tpu.vector_store %arg11[%c0_100, %c0_101], %160 {strides = array<i32>} : memref<8x128xf32, #tpu.memory_space<vmem>>, vector<8x128xf32>,
    } else {
    }
    %c0 = arith.constant 0 : index
    %c0_1 = arith.constant 0 : index
    %3 = vector.load %arg5[%c0, %c0_1] : memref<128x128xf32, #tpu.memory_space<vmem>>, vector<128x128xf32>
    %c0_2 = arith.constant 0 : index
    %c0_3 = arith.constant 0 : index
    %4 = vector.load %arg6[%c0_2, %c0_3] : memref<128x128xf32, #tpu.memory_space<vmem>>, vector<128x128xf32>
    %c0_4 = arith.constant 0 : index
    %c0_5 = arith.constant 0 : index
    %5 = vector.load %arg7[%c0_4, %c0_5] : memref<1x128xf32, #tpu.memory_space<vmem>>, vector<1x128xf32>
    %c0_6 = arith.constant 0 : index
    %c0_7 = arith.constant 0 : index
    %6 = vector.load %arg9[%c0_6, %c0_7] : memref<8x128xf32, #tpu.memory_space<vmem>>, vector<8x128xf32>
    %c0_8 = arith.constant 0 : index
    %c0_9 = arith.constant 0 : index
    %7 = vector.load %arg10[%c0_8, %c0_9] : memref<8x128xf32, #tpu.memory_space<vmem>>, vector<8x128xf32>
    %c0_10 = arith.constant 0 : index
    %c0_11 = arith.constant 0 : index
    %8 = vector.load %arg11[%c0_10, %c0_11] : memref<8x128xf32, #tpu.memory_space<vmem>>, vector<8x128xf32>
    %c0_12 = arith.constant 0 : index
    %c0_13 = arith.constant 0 : index
    %c0_14 = arith.constant 0 : index
    %9 = vector.load %arg1[%c0_12, %c0_13, %c0_14] : memref<8x8x128xf32, #tpu.memory_space<vmem>>, vector<1x8x128xf32>
    %10 = vector.shape_cast %9 : vector<1x8x128xf32> to vector<8x128xf32>
    %cst = arith.constant 5.000000e-01 : f32
    %11 = vector.broadcast %cst : f32 to vector<8x128xf32>
    %12 = arith.mulf %11, %6 : vector<8x128xf32>
    %cst_15 = arith.constant dense<0.000000e+00> : vector<8x128xf32>
    %13 = tpu.matmul %7, %3, %cst_15 {dimension_numbers = #tpu.dot_dimension_numbers<[1], [0], [0], [1], [0, 0, 1, 1], [], []>} : vector<8x128xf32>, vector<128x128xf32>, vector<8x128xf32> -> vector<8x128xf32>
    %14 = arith.addf %13, %10 : vector<8x128xf32>
    %15 = arith.addf %12, %14 : vector<8x128xf32>
    %16 = math.tanh %15 : vector<8x128xf32>
    %cst_16 = arith.constant 7.500000e-01 : f32
    %17 = vector.broadcast %cst_16 : f32 to vector<8x128xf32>
    %18 = arith.mulf %17, %8 : vector<8x128xf32>
    %cst_17 = arith.constant dense<0.000000e+00> : vector<8x128xf32>
    %19 = tpu.matmul %16, %4, %cst_17 {dimension_numbers = #tpu.dot_dimension_numbers<[1], [0], [0], [1], [0, 0, 1, 1], [], []>} : vector<8x128xf32>, vector<128x128xf32>, vector<8x128xf32> -> vector<8x128xf32>
    %20 = vector.broadcast %5 : vector<1x128xf32> to vector<8x128xf32>
    %21 = arith.addf %19, %20 : vector<8x128xf32>
    %22 = arith.addf %18, %21 : vector<8x128xf32>
    %23 = math.tanh %22 : vector<8x128xf32>
    %c0_18 = arith.constant 0 : index
    %c0_19 = arith.constant 0 : index
    %c0_20 = arith.constant 0 : index
    %24 = vector.load %arg8[%c0_18, %c0_19, %c0_20] : memref<8x8x128xf32, #tpu.memory_space<vmem>>, vector<1x8x128xf32>
    %25 = vector.shape_cast %24 : vector<1x8x128xf32> to vector<8x128xf32>
    %26 = vector.shape_cast %23 : vector<8x128xf32> to vector<1x8x128xf32>
    tpu.vector_store %arg8[%c0_18, %c0_19, %c0_20], %26 {strides = array<i32>} : memref<8x8x128xf32, #tpu.memory_space<vmem>>, vector<1x8x128xf32>,
    %c1 = arith.constant 1 : index
    %c0_21 = arith.constant 0 : index
    %c0_22 = arith.constant 0 : index
    %27 = vector.load %arg1[%c1, %c0_21, %c0_22] : memref<8x8x128xf32, #tpu.memory_space<vmem>>, vector<1x8x128xf32>
    %28 = vector.shape_cast %27 : vector<1x8x128xf32> to vector<8x128xf32>
    %cst_23 = arith.constant 5.000000e-01 : f32
    %29 = vector.broadcast %cst_23 : f32 to vector<8x128xf32>
    %30 = arith.mulf %29, %15 : vector<8x128xf32>
    %cst_24 = arith.constant dense<0.000000e+00> : vector<8x128xf32>
    %31 = tpu.matmul %16, %3, %cst_24 {dimension_numbers = #tpu.dot_dimension_numbers<[1], [0], [0], [1], [0, 0, 1, 1], [], []>} : vector<8x128xf32>, vector<128x128xf32>, vector<8x128xf32> -> vector<8x128xf32>
    %32 = arith.addf %31, %28 : vector<8x128xf32>
    %33 = arith.addf %30, %32 : vector<8x128xf32>
    %34 = math.tanh %33 : vector<8x128xf32>
    %cst_25 = arith.constant 7.500000e-01 : f32
    %35 = vector.broadcast %cst_25 : f32 to vector<8x128xf32>
    %36 = arith.mulf %35, %22 : vector<8x128xf32>
    %cst_26 = arith.constant dense<0.000000e+00> : vector<8x128xf32>
    %37 = tpu.matmul %34, %4, %cst_26 {dimension_numbers = #tpu.dot_dimension_numbers<[1], [0], [0], [1], [0, 0, 1, 1], [], []>} : vector<8x128xf32>, vector<128x128xf32>, vector<8x128xf32> -> vector<8x128xf32>
    %38 = vector.broadcast %5 : vector<1x128xf32> to vector<8x128xf32>
    %39 = arith.addf %37, %38 : vector<8x128xf32>
    %40 = arith.addf %36, %39 : vector<8x128xf32>
    %41 = math.tanh %40 : vector<8x128xf32>
    %c1_27 = arith.constant 1 : index
    %c0_28 = arith.constant 0 : index
    %c0_29 = arith.constant 0 : index
    %42 = vector.load %arg8[%c1_27, %c0_28, %c0_29] : memref<8x8x128xf32, #tpu.memory_space<vmem>>, vector<1x8x128xf32>
    %43 = vector.shape_cast %42 : vector<1x8x128xf32> to vector<8x128xf32>
    %44 = vector.shape_cast %41 : vector<8x128xf32> to vector<1x8x128xf32>
    tpu.vector_store %arg8[%c1_27, %c0_28, %c0_29], %44 {strides = array<i32>} : memref<8x8x128xf32, #tpu.memory_space<vmem>>, vector<1x8x128xf32>,
    %c2 = arith.constant 2 : index
    %c0_30 = arith.constant 0 : index
    %c0_31 = arith.constant 0 : index
    %45 = vector.load %arg1[%c2, %c0_30, %c0_31] : memref<8x8x128xf32, #tpu.memory_space<vmem>>, vector<1x8x128xf32>
    %46 = vector.shape_cast %45 : vector<1x8x128xf32> to vector<8x128xf32>
    %cst_32 = arith.constant 5.000000e-01 : f32
    %47 = vector.broadcast %cst_32 : f32 to vector<8x128xf32>
    %48 = arith.mulf %47, %33 : vector<8x128xf32>
    %cst_33 = arith.constant dense<0.000000e+00> : vector<8x128xf32>
    %49 = tpu.matmul %34, %3, %cst_33 {dimension_numbers = #tpu.dot_dimension_numbers<[1], [0], [0], [1], [0, 0, 1, 1], [], []>} : vector<8x128xf32>, vector<128x128xf32>, vector<8x128xf32> -> vector<8x128xf32>
    %50 = arith.addf %49, %46 : vector<8x128xf32>
    %51 = arith.addf %48, %50 : vector<8x128xf32>
    %52 = math.tanh %51 : vector<8x128xf32>
    %cst_34 = arith.constant 7.500000e-01 : f32
    %53 = vector.broadcast %cst_34 : f32 to vector<8x128xf32>
    %54 = arith.mulf %53, %40 : vector<8x128xf32>
    %cst_35 = arith.constant dense<0.000000e+00> : vector<8x128xf32>
    %55 = tpu.matmul %52, %4, %cst_35 {dimension_numbers = #tpu.dot_dimension_numbers<[1], [0], [0], [1], [0, 0, 1, 1], [], []>} : vector<8x128xf32>, vector<128x128xf32>, vector<8x128xf32> -> vector<8x128xf32>
    %56 = vector.broadcast %5 : vector<1x128xf32> to vector<8x128xf32>
    %57 = arith.addf %55, %56 : vector<8x128xf32>
    %58 = arith.addf %54, %57 : vector<8x128xf32>
    %59 = math.tanh %58 : vector<8x128xf32>
    %c2_36 = arith.constant 2 : index
    %c0_37 = arith.constant 0 : index
    %c0_38 = arith.constant 0 : index
    %60 = vector.load %arg8[%c2_36, %c0_37, %c0_38] : memref<8x8x128xf32, #tpu.memory_space<vmem>>, vector<1x8x128xf32>
    %61 = vector.shape_cast %60 : vector<1x8x128xf32> to vector<8x128xf32>
    %62 = vector.shape_cast %59 : vector<8x128xf32> to vector<1x8x128xf32>
    tpu.vector_store %arg8[%c2_36, %c0_37, %c0_38], %62 {strides = array<i32>} : memref<8x8x128xf32, #tpu.memory_space<vmem>>, vector<1x8x128xf32>,
    %c3 = arith.constant 3 : index
    %c0_39 = arith.constant 0 : index
    %c0_40 = arith.constant 0 : index
    %63 = vector.load %arg1[%c3, %c0_39, %c0_40] : memref<8x8x128xf32, #tpu.memory_space<vmem>>, vector<1x8x128xf32>
    %64 = vector.shape_cast %63 : vector<1x8x128xf32> to vector<8x128xf32>
    %cst_41 = arith.constant 5.000000e-01 : f32
    %65 = vector.broadcast %cst_41 : f32 to vector<8x128xf32>
    %66 = arith.mulf %65, %51 : vector<8x128xf32>
    %cst_42 = arith.constant dense<0.000000e+00> : vector<8x128xf32>
    %67 = tpu.matmul %52, %3, %cst_42 {dimension_numbers = #tpu.dot_dimension_numbers<[1], [0], [0], [1], [0, 0, 1, 1], [], []>} : vector<8x128xf32>, vector<128x128xf32>, vector<8x128xf32> -> vector<8x128xf32>
    %68 = arith.addf %67, %64 : vector<8x128xf32>
    %69 = arith.addf %66, %68 : vector<8x128xf32>
    %70 = math.tanh %69 : vector<8x128xf32>
    %cst_43 = arith.constant 7.500000e-01 : f32
    %71 = vector.broadcast %cst_43 : f32 to vector<8x128xf32>
    %72 = arith.mulf %71, %58 : vector<8x128xf32>
    %cst_44 = arith.constant dense<0.000000e+00> : vector<8x128xf32>
    %73 = tpu.matmul %70, %4, %cst_44 {dimension_numbers = #tpu.dot_dimension_numbers<[1], [0], [0], [1], [0, 0, 1, 1], [], []>} : vector<8x128xf32>, vector<128x128xf32>, vector<8x128xf32> -> vector<8x128xf32>
    %74 = vector.broadcast %5 : vector<1x128xf32> to vector<8x128xf32>
    %75 = arith.addf %73, %74 : vector<8x128xf32>
    %76 = arith.addf %72, %75 : vector<8x128xf32>
    %77 = math.tanh %76 : vector<8x128xf32>
    %c3_45 = arith.constant 3 : index
    %c0_46 = arith.constant 0 : index
    %c0_47 = arith.constant 0 : index
    %78 = vector.load %arg8[%c3_45, %c0_46, %c0_47] : memref<8x8x128xf32, #tpu.memory_space<vmem>>, vector<1x8x128xf32>
    %79 = vector.shape_cast %78 : vector<1x8x128xf32> to vector<8x128xf32>
    %80 = vector.shape_cast %77 : vector<8x128xf32> to vector<1x8x128xf32>
    tpu.vector_store %arg8[%c3_45, %c0_46, %c0_47], %80 {strides = array<i32>} : memref<8x8x128xf32, #tpu.memory_space<vmem>>, vector<1x8x128xf32>,
    %c4 = arith.constant 4 : index
    %c0_48 = arith.constant 0 : index
    %c0_49 = arith.constant 0 : index
    %81 = vector.load %arg1[%c4, %c0_48, %c0_49] : memref<8x8x128xf32, #tpu.memory_space<vmem>>, vector<1x8x128xf32>
    %82 = vector.shape_cast %81 : vector<1x8x128xf32> to vector<8x128xf32>
    %cst_50 = arith.constant 5.000000e-01 : f32
    %83 = vector.broadcast %cst_50 : f32 to vector<8x128xf32>
    %84 = arith.mulf %83, %69 : vector<8x128xf32>
    %cst_51 = arith.constant dense<0.000000e+00> : vector<8x128xf32>
    %85 = tpu.matmul %70, %3, %cst_51 {dimension_numbers = #tpu.dot_dimension_numbers<[1], [0], [0], [1], [0, 0, 1, 1], [], []>} : vector<8x128xf32>, vector<128x128xf32>, vector<8x128xf32> -> vector<8x128xf32>
    %86 = arith.addf %85, %82 : vector<8x128xf32>
    %87 = arith.addf %84, %86 : vector<8x128xf32>
    %88 = math.tanh %87 : vector<8x128xf32>
    %cst_52 = arith.constant 7.500000e-01 : f32
    %89 = vector.broadcast %cst_52 : f32 to vector<8x128xf32>
    %90 = arith.mulf %89, %76 : vector<8x128xf32>
    %cst_53 = arith.constant dense<0.000000e+00> : vector<8x128xf32>
    %91 = tpu.matmul %88, %4, %cst_53 {dimension_numbers = #tpu.dot_dimension_numbers<[1], [0], [0], [1], [0, 0, 1, 1], [], []>} : vector<8x128xf32>, vector<128x128xf32>, vector<8x128xf32> -> vector<8x128xf32>
    %92 = vector.broadcast %5 : vector<1x128xf32> to vector<8x128xf32>
    %93 = arith.addf %91, %92 : vector<8x128xf32>
    %94 = arith.addf %90, %93 : vector<8x128xf32>
    %95 = math.tanh %94 : vector<8x128xf32>
    %c4_54 = arith.constant 4 : index
    %c0_55 = arith.constant 0 : index
    %c0_56 = arith.constant 0 : index
    %96 = vector.load %arg8[%c4_54, %c0_55, %c0_56] : memref<8x8x128xf32, #tpu.memory_space<vmem>>, vector<1x8x128xf32>
    %97 = vector.shape_cast %96 : vector<1x8x128xf32> to vector<8x128xf32>
    %98 = vector.shape_cast %95 : vector<8x128xf32> to vector<1x8x128xf32>
    tpu.vector_store %arg8[%c4_54, %c0_55, %c0_56], %98 {strides = array<i32>} : memref<8x8x128xf32, #tpu.memory_space<vmem>>, vector<1x8x128xf32>,
    %c5 = arith.constant 5 : index
    %c0_57 = arith.constant 0 : index
    %c0_58 = arith.constant 0 : index
    %99 = vector.load %arg1[%c5, %c0_57, %c0_58] : memref<8x8x128xf32, #tpu.memory_space<vmem>>, vector<1x8x128xf32>
    %100 = vector.shape_cast %99 : vector<1x8x128xf32> to vector<8x128xf32>
    %cst_59 = arith.constant 5.000000e-01 : f32
    %101 = vector.broadcast %cst_59 : f32 to vector<8x128xf32>
    %102 = arith.mulf %101, %87 : vector<8x128xf32>
    %cst_60 = arith.constant dense<0.000000e+00> : vector<8x128xf32>
    %103 = tpu.matmul %88, %3, %cst_60 {dimension_numbers = #tpu.dot_dimension_numbers<[1], [0], [0], [1], [0, 0, 1, 1], [], []>} : vector<8x128xf32>, vector<128x128xf32>, vector<8x128xf32> -> vector<8x128xf32>
    %104 = arith.addf %103, %100 : vector<8x128xf32>
    %105 = arith.addf %102, %104 : vector<8x128xf32>
    %106 = math.tanh %105 : vector<8x128xf32>
    %cst_61 = arith.constant 7.500000e-01 : f32
    %107 = vector.broadcast %cst_61 : f32 to vector<8x128xf32>
    %108 = arith.mulf %107, %94 : vector<8x128xf32>
    %cst_62 = arith.constant dense<0.000000e+00> : vector<8x128xf32>
    %109 = tpu.matmul %106, %4, %cst_62 {dimension_numbers = #tpu.dot_dimension_numbers<[1], [0], [0], [1], [0, 0, 1, 1], [], []>} : vector<8x128xf32>, vector<128x128xf32>, vector<8x128xf32> -> vector<8x128xf32>
    %110 = vector.broadcast %5 : vector<1x128xf32> to vector<8x128xf32>
    %111 = arith.addf %109, %110 : vector<8x128xf32>
    %112 = arith.addf %108, %111 : vector<8x128xf32>
    %113 = math.tanh %112 : vector<8x128xf32>
    %c5_63 = arith.constant 5 : index
    %c0_64 = arith.constant 0 : index
    %c0_65 = arith.constant 0 : index
    %114 = vector.load %arg8[%c5_63, %c0_64, %c0_65] : memref<8x8x128xf32, #tpu.memory_space<vmem>>, vector<1x8x128xf32>
    %115 = vector.shape_cast %114 : vector<1x8x128xf32> to vector<8x128xf32>
    %116 = vector.shape_cast %113 : vector<8x128xf32> to vector<1x8x128xf32>
    tpu.vector_store %arg8[%c5_63, %c0_64, %c0_65], %116 {strides = array<i32>} : memref<8x8x128xf32, #tpu.memory_space<vmem>>, vector<1x8x128xf32>,
    %c6 = arith.constant 6 : index
    %c0_66 = arith.constant 0 : index
    %c0_67 = arith.constant 0 : index
    %117 = vector.load %arg1[%c6, %c0_66, %c0_67] : memref<8x8x128xf32, #tpu.memory_space<vmem>>, vector<1x8x128xf32>
    %118 = vector.shape_cast %117 : vector<1x8x128xf32> to vector<8x128xf32>
    %cst_68 = arith.constant 5.000000e-01 : f32
    %119 = vector.broadcast %cst_68 : f32 to vector<8x128xf32>
    %120 = arith.mulf %119, %105 : vector<8x128xf32>
    %cst_69 = arith.constant dense<0.000000e+00> : vector<8x128xf32>
    %121 = tpu.matmul %106, %3, %cst_69 {dimension_numbers = #tpu.dot_dimension_numbers<[1], [0], [0], [1], [0, 0, 1, 1], [], []>} : vector<8x128xf32>, vector<128x128xf32>, vector<8x128xf32> -> vector<8x128xf32>
    %122 = arith.addf %121, %118 : vector<8x128xf32>
    %123 = arith.addf %120, %122 : vector<8x128xf32>
    %124 = math.tanh %123 : vector<8x128xf32>
    %cst_70 = arith.constant 7.500000e-01 : f32
    %125 = vector.broadcast %cst_70 : f32 to vector<8x128xf32>
    %126 = arith.mulf %125, %112 : vector<8x128xf32>
    %cst_71 = arith.constant dense<0.000000e+00> : vector<8x128xf32>
    %127 = tpu.matmul %124, %4, %cst_71 {dimension_numbers = #tpu.dot_dimension_numbers<[1], [0], [0], [1], [0, 0, 1, 1], [], []>} : vector<8x128xf32>, vector<128x128xf32>, vector<8x128xf32> -> vector<8x128xf32>
    %128 = vector.broadcast %5 : vector<1x128xf32> to vector<8x128xf32>
    %129 = arith.addf %127, %128 : vector<8x128xf32>
    %130 = arith.addf %126, %129 : vector<8x128xf32>
    %131 = math.tanh %130 : vector<8x128xf32>
    %c6_72 = arith.constant 6 : index
    %c0_73 = arith.constant 0 : index
    %c0_74 = arith.constant 0 : index
    %132 = vector.load %arg8[%c6_72, %c0_73, %c0_74] : memref<8x8x128xf32, #tpu.memory_space<vmem>>, vector<1x8x128xf32>
    %133 = vector.shape_cast %132 : vector<1x8x128xf32> to vector<8x128xf32>
    %134 = vector.shape_cast %131 : vector<8x128xf32> to vector<1x8x128xf32>
    tpu.vector_store %arg8[%c6_72, %c0_73, %c0_74], %134 {strides = array<i32>} : memref<8x8x128xf32, #tpu.memory_space<vmem>>, vector<1x8x128xf32>,
    %c7 = arith.constant 7 : index
    %c0_75 = arith.constant 0 : index
    %c0_76 = arith.constant 0 : index
    %135 = vector.load %arg1[%c7, %c0_75, %c0_76] : memref<8x8x128xf32, #tpu.memory_space<vmem>>, vector<1x8x128xf32>
    %136 = vector.shape_cast %135 : vector<1x8x128xf32> to vector<8x128xf32>
    %cst_77 = arith.constant 5.000000e-01 : f32
    %137 = vector.broadcast %cst_77 : f32 to vector<8x128xf32>
    %138 = arith.mulf %137, %123 : vector<8x128xf32>
    %cst_78 = arith.constant dense<0.000000e+00> : vector<8x128xf32>
    %139 = tpu.matmul %124, %3, %cst_78 {dimension_numbers = #tpu.dot_dimension_numbers<[1], [0], [0], [1], [0, 0, 1, 1], [], []>} : vector<8x128xf32>, vector<128x128xf32>, vector<8x128xf32> -> vector<8x128xf32>
    %140 = arith.addf %139, %136 : vector<8x128xf32>
    %141 = arith.addf %138, %140 : vector<8x128xf32>
    %142 = math.tanh %141 : vector<8x128xf32>
    %cst_79 = arith.constant 7.500000e-01 : f32
    %143 = vector.broadcast %cst_79 : f32 to vector<8x128xf32>
    %144 = arith.mulf %143, %130 : vector<8x128xf32>
    %cst_80 = arith.constant dense<0.000000e+00> : vector<8x128xf32>
    %145 = tpu.matmul %142, %4, %cst_80 {dimension_numbers = #tpu.dot_dimension_numbers<[1], [0], [0], [1], [0, 0, 1, 1], [], []>} : vector<8x128xf32>, vector<128x128xf32>, vector<8x128xf32> -> vector<8x128xf32>
    %146 = vector.broadcast %5 : vector<1x128xf32> to vector<8x128xf32>
    %147 = arith.addf %145, %146 : vector<8x128xf32>
    %148 = arith.addf %144, %147 : vector<8x128xf32>
    %149 = math.tanh %148 : vector<8x128xf32>
    %c7_81 = arith.constant 7 : index
    %c0_82 = arith.constant 0 : index
    %c0_83 = arith.constant 0 : index
    %150 = vector.load %arg8[%c7_81, %c0_82, %c0_83] : memref<8x8x128xf32, #tpu.memory_space<vmem>>, vector<1x8x128xf32>
    %151 = vector.shape_cast %150 : vector<1x8x128xf32> to vector<8x128xf32>
    %152 = vector.shape_cast %149 : vector<8x128xf32> to vector<1x8x128xf32>
    tpu.vector_store %arg8[%c7_81, %c0_82, %c0_83], %152 {strides = array<i32>} : memref<8x8x128xf32, #tpu.memory_space<vmem>>, vector<1x8x128xf32>,
    %c0_84 = arith.constant 0 : index
    %c0_85 = arith.constant 0 : index
    %153 = vector.load %arg9[%c0_84, %c0_85] : memref<8x128xf32, #tpu.memory_space<vmem>>, vector<8x128xf32>
    tpu.vector_store %arg9[%c0_84, %c0_85], %141 {strides = array<i32>} : memref<8x128xf32, #tpu.memory_space<vmem>>, vector<8x128xf32>,
    %c0_86 = arith.constant 0 : index
    %c0_87 = arith.constant 0 : index
    %154 = vector.load %arg10[%c0_86, %c0_87] : memref<8x128xf32, #tpu.memory_space<vmem>>, vector<8x128xf32>
    tpu.vector_store %arg10[%c0_86, %c0_87], %142 {strides = array<i32>} : memref<8x128xf32, #tpu.memory_space<vmem>>, vector<8x128xf32>,
    %c0_88 = arith.constant 0 : index
    %c0_89 = arith.constant 0 : index
    %155 = vector.load %arg11[%c0_88, %c0_89] : memref<8x128xf32, #tpu.memory_space<vmem>>, vector<8x128xf32>
    tpu.vector_store %arg11[%c0_88, %c0_89], %148 {strides = array<i32>} : memref<8x128xf32, #tpu.memory_space<vmem>>, vector<8x128xf32>,
    return
  }
  func.func @transform_0(%arg0: i32) -> (i32, i32, i32) {
    %c0_i32 = arith.constant 0 : i32
    %c0_i32_0 = arith.constant 0 : i32
    %c0_i32_1 = arith.constant 0 : i32
    return %arg0, %c0_i32, %c0_i32_0 : i32, i32, i32
  }
  func.func @transform_1(%arg0: i32) -> (i32, i32) {
    %c0_i32 = arith.constant 0 : i32
    %c0_i32_0 = arith.constant 0 : i32
    %c0_i32_1 = arith.constant 0 : i32
    return %c0_i32, %c0_i32_0 : i32, i32
  }
  func.func @transform_2(%arg0: i32) -> (i32, i32) {
    %c0_i32 = arith.constant 0 : i32
    %c0_i32_0 = arith.constant 0 : i32
    %c0_i32_1 = arith.constant 0 : i32
    return %c0_i32, %c0_i32_0 : i32, i32
  }
  func.func @transform_3(%arg0: i32) -> (i32, i32) {
    %c0_i32 = arith.constant 0 : i32
    %c0_i32_0 = arith.constant 0 : i32
    %c0_i32_1 = arith.constant 0 : i32
    return %c0_i32, %c0_i32_0 : i32, i32
  }
  func.func @transform_4(%arg0: i32) -> (i32, i32) {
    %c0_i32 = arith.constant 0 : i32
    %c0_i32_0 = arith.constant 0 : i32
    %c0_i32_1 = arith.constant 0 : i32
    return %c0_i32, %c0_i32_0 : i32, i32
  }
  func.func @transform_5(%arg0: i32) -> (i32, i32) {
    %c0_i32 = arith.constant 0 : i32
    %c0_i32_0 = arith.constant 0 : i32
    %c0_i32_1 = arith.constant 0 : i32
    return %c0_i32, %c0_i32_0 : i32, i32
  }
  func.func @transform_6(%arg0: i32) -> (i32, i32) {
    %c0_i32 = arith.constant 0 : i32
    %c0_i32_0 = arith.constant 0 : i32
    %c0_i32_1 = arith.constant 0 : i32
    return %c0_i32, %c0_i32_0 : i32, i32
  }
  func.func @transform_7(%arg0: i32) -> (i32, i32, i32) {
    %c0_i32 = arith.constant 0 : i32
    %c0_i32_0 = arith.constant 0 : i32
    %c0_i32_1 = arith.constant 0 : i32
    return %arg0, %c0_i32, %c0_i32_0 : i32, i32, i32
  }
  func.func @transform_8(%arg0: i32) -> (i32, i32) {
    %c0_i32 = arith.constant 0 : i32
    %c0_i32_0 = arith.constant 0 : i32
    %c0_i32_1 = arith.constant 0 : i32
    return %c0_i32, %c0_i32_0 : i32, i32
  }
  func.func @transform_9(%arg0: i32) -> (i32, i32) {
    %c0_i32 = arith.constant 0 : i32
    %c0_i32_0 = arith.constant 0 : i32
    %c0_i32_1 = arith.constant 0 : i32
    return %c0_i32, %c0_i32_0 : i32, i32
  }
  func.func @transform_10(%arg0: i32) -> (i32, i32) {
    %c0_i32 = arith.constant 0 : i32
    %c0_i32_0 = arith.constant 0 : i32
    %c0_i32_1 = arith.constant 0 : i32
    return %c0_i32, %c0_i32_0 : i32, i32
  }
}

</mosaic_0001>

<llo_original>
// kernel: _dm_echo1_seq_impl.1
$region0: #{_dm_echo1_seq_impl.1}
  #allocation0 [shape = 'u32[]', space=smem, size = 0x4, offset = 0x4, fixed_abs, tag = 'smem constant byte address 0x4 - core index']
  #allocation1 [shape = 'u32[144,128]{1,0:T(1,128)}', space=vmem, size = 0x12000, scoped, tag = 'internal scratch']
  %s0 = inlined_call_operand.vmem [shape: f32[8,8,128], index: 0, kind: input, shape index: {}]
  %s1 = inlined_call_operand.vmem [shape: f32[8,128], index: 1, kind: input, shape index: {}, may-alias: {1,8}]
  %s2 = inlined_call_operand.vmem [shape: f32[8,128], index: 2, kind: input, shape index: {}, may-alias: {2,9}]
  %s3 = inlined_call_operand.vmem [shape: f32[8,128], index: 3, kind: input, shape index: {}, may-alias: {3,10}]
  %s4 = inlined_call_operand.vmem [shape: f32[128,128], index: 4, kind: input, shape index: {}]
  %s5 = inlined_call_operand.hbm [shape: f32[128,128], index: 5, kind: input, shape index: {}]
  %s6 = inlined_call_operand.vmem [shape: f32[1,128], index: 6, kind: input, shape index: {}]
  %s7 = inlined_call_operand.vmem [shape: f32[8,8,128], index: 7, kind: output, shape index: {0}]
  %s8 = inlined_call_operand.vmem [shape: f32[8,128], index: 8, kind: output, shape index: {1}, may-alias: {1,8}]
  %s9 = inlined_call_operand.vmem [shape: f32[8,128], index: 9, kind: output, shape index: {2}, may-alias: {2,9}]
  %s10 = inlined_call_operand.vmem [shape: f32[8,128], index: 10, kind: output, shape index: {3}, may-alias: {3,10}]
  %11 = xla_tuple %s7, %s8, %s9, %s10
  %s12 = sld [smem:[#allocation0]]
  $region70: #{_dm_echo1_seq_impl.1} parent=0
    _
  %s14 = ssub.s32 1, %s12
  %s15 = scalar_select 0, %s14, %s12
  $region1: #{_dm_echo1_seq_impl.1} parent=0
    #allocation2 [shape = 'u8[65536]{0}', space=vmem, size = 0x10000, scoped, tag = 'input window, operand 5, single buffered']
    #allocation3 [shape = 's32[1]{0}', space=sflag, size = 0x4, scoped, tag = 'scoped memory for _dm_echo1_seq_impl.1']
    %16 = vsyncpa [#allocation3], 0
    // Predicated region
    $region2: #{_dm_echo1_seq_impl.1} parent=1 // pred_check
      _
    $region3: #{_dm_echo1_seq_impl.1} parent=1 // pred_check_branch
      %18 = sbr.rel (0) target = $region5
    $region4: #{_dm_echo1_seq_impl.1} parent=1 // pred_region
      _
    $region5: #{_dm_echo1_seq_impl.1} parent=1 // pred_fallthru
      _
    // Predicated region
    $region6: #{_dm_echo1_seq_impl.1} parent=1 // pred_check
      _
    $region7: #{_dm_echo1_seq_impl.1} parent=1 // pred_check_branch
      %20 = sbr.rel (0) target = $region9
    $region8: #{_dm_echo1_seq_impl.1} parent=1 // pred_region
      _
    $region9: #{_dm_echo1_seq_impl.1} parent=1 // pred_fallthru
      _
    // Predicated region
    $region10: #{_dm_echo1_seq_impl.1} parent=1 // pred_check
      _
    $region11: #{_dm_echo1_seq_impl.1} parent=1 // pred_check_branch
      %22 = sbr.rel (0) target = $region13
    $region12: #{_dm_echo1_seq_impl.1} parent=1 // pred_region
      _
    $region13: #{_dm_echo1_seq_impl.1} parent=1 // pred_fallthru
      _
    // Predicated region
    $region14: #{_dm_echo1_seq_impl.1} parent=1 // pred_check
      _
    $region15: #{_dm_echo1_seq_impl.1} parent=1 // pred_check_branch
      %24 = sbr.rel (0) target = $region17
    $region16: #{_dm_echo1_seq_impl.1} parent=1 // pred_region
      _
    $region17: #{_dm_echo1_seq_impl.1} parent=1 // pred_fallthru
      _
    // Predicated region
    $region18: #{_dm_echo1_seq_impl.1} parent=1 // pred_check
      _
    $region19: #{_dm_echo1_seq_impl.1} parent=1 // pred_check_branch
      %26 = sbr.rel (0) target = $region21
    $region20: #{_dm_echo1_seq_impl.1} parent=1 // pred_region
      _
    $region21: #{_dm_echo1_seq_impl.1} parent=1 // pred_fallthru
      _
    // Predicated region
    $region22: #{_dm_echo1_seq_impl.1} parent=1 // pred_check
      _
    $region23: #{_dm_echo1_seq_impl.1} parent=1 // pred_check_branch
      %28 = sbr.rel (0) target = $region25
    $region24: #{_dm_echo1_seq_impl.1} parent=1 // pred_region
      %s30 = ssub.s32 2048, 2048
      %31 = vsyncadd [#allocation3], %s30
      %s32 = sshll.u32 [#allocation2], 4
      %s33 = int_to_ptr.vmem [resolvable:$true] %s32
      %38 = dma.hbm_to_vmem [thread:$0]  %s5, 2048, %s33, [#allocation3], 128, 128, 8
    $region25: #{_dm_echo1_seq_impl.1} parent=1 // pred_fallthru
      _
    // Predicated region
    $region26: #{_dm_echo1_seq_impl.1} parent=1 // pred_check
      _
    $region27: #{_dm_echo1_seq_impl.1} parent=1 // pred_check_branch
      %40 = sbr.rel (0) target = $region29
    $region28: #{_dm_echo1_seq_impl.1} parent=1 // pred_region
      _
    $region29: #{_dm_echo1_seq_impl.1} parent=1 // pred_fallthru
      _
    // Predicated region
    $region30: #{_dm_echo1_seq_impl.1} parent=1 // pred_check
      _
    $region31: #{_dm_echo1_seq_impl.1} parent=1 // pred_check_branch
      %42 = sbr.rel (0) target = $region33
    $region32: #{_dm_echo1_seq_impl.1} parent=1 // pred_region
      %43 = dma.done [#allocation3], 2048
    $region33: #{_dm_echo1_seq_impl.1} parent=1 // pred_fallthru
      _
    %p44 = scmp.eq.s32.totalorder 0, 0
    // Predicated region
    $region34: #{_dm_echo1_seq_impl.1} parent=1 // pred_check
      %p45 = pneg %p44
    $region35: #{_dm_echo1_seq_impl.1} parent=1 // pred_check_branch
      %47 = sbr.rel (%p45) target = $region37
    $region36: #{_dm_echo1_seq_impl.1} parent=1 // pred_region
      %v48 = vld [vmem:[%s1] sm:$0xff]
      %49 = vst [vmem:[%s8] sm:$0xff] %v48
      %v50 = vld [vmem:[%s2] sm:$0xff]
      %51 = vst [vmem:[%s9] sm:$0xff] %v50
      %v52 = vld [vmem:[%s3] sm:$0xff]
      %53 = vst [vmem:[%s10] sm:$0xff] %v52
    $region37: #{_dm_echo1_seq_impl.1} parent=1 // pred_fallthru
      _
    %v54 = vld [vmem:[%s4] sm:$0xff]
    %v55 = vld [vmem:[%s4 + $0x8] sm:$0xff]
    %v56 = vld [vmem:[%s4 + $0x10] sm:$0xff]
    %v57 = vld [vmem:[%s4 + $0x18] sm:$0xff]
    %v58 = vld [vmem:[%s4 + $0x20] sm:$0xff]
    %v59 = vld [vmem:[%s4 + $0x28] sm:$0xff]
    %v60 = vld [vmem:[%s4 + $0x30] sm:$0xff]
    %v61 = vld [vmem:[%s4 + $0x38] sm:$0xff]
    %v62 = vld [vmem:[%s4 + $0x40] sm:$0xff]
    %v63 = vld [vmem:[%s4 + $0x48] sm:$0xff]
    %v64 = vld [vmem:[%s4 + $0x50] sm:$0xff]
    %v65 = vld [vmem:[%s4 + $0x58] sm:$0xff]
    %v66 = vld [vmem:[%s4 + $0x60] sm:$0xff]
    %v67 = vld [vmem:[%s4 + $0x68] sm:$0xff]
    %v68 = vld [vmem:[%s4 + $0x70] sm:$0xff]
    %v69 = vld [vmem:[%s4 + $0x78] sm:$0xff]
    %v70 = vld [vmem:[#allocation2] sm:$0xff]
    %v71 = vld [vmem:[#allocation2 + $0x8] sm:$0xff]
    %v72 = vld [vmem:[#allocation2 + $0x10] sm:$0xff]
    %v73 = vld [vmem:[#allocation2 + $0x18] sm:$0xff]
    %v74 = vld [vmem:[#allocation2 + $0x20] sm:$0xff]
    %v75 = vld [vmem:[#allocation2 + $0x28] sm:$0xff]
    %v76 = vld [vmem:[#allocation2 + $0x30] sm:$0xff]
    %v77 = vld [vmem:[#allocation2 + $0x38] sm:$0xff]
    %v78 = vld [vmem:[#allocation2 + $0x40] sm:$0xff]
    %v79 = vld [vmem:[#allocation2 + $0x48] sm:$0xff]
    %v80 = vld [vmem:[#allocation2 + $0x50] sm:$0xff]
    %v81 = vld [vmem:[#allocation2 + $0x58] sm:$0xff]
    %v82 = vld [vmem:[#allocation2 + $0x60] sm:$0xff]
    %v83 = vld [vmem:[#allocation2 + $0x68] sm:$0xff]
    %v84 = vld [vmem:[#allocation2 + $0x70] sm:$0xff]
    %v85 = vld [vmem:[#allocation2 + $0x78] sm:$0xff]
    %v86 = vld [vmem:[%s6] sm:$0x1]
    %v87 = vld [vmem:[%s8] sm:$0xff]
    %v88 = vld [vmem:[%s9] sm:$0xff]
    %v89 = vld [vmem:[%s10] sm:$0xff]
    %v90 = vld [vmem:[%s0] sm:$0xff]
    %v91 = vmul.f32 %v87, 0.5
    %92 = vmatprep.subr.mxu0 0.0
    %93 = vmatpush1.msra.mxu0 %v54
    %94 = vmatprep.subr.mxu0 0.0
    %95 = vmatpush1.msra.mxu0 %v55
    %96 = vmatprep.subr.mxu0 0.0
    %97 = vmatpush1.msra.mxu0 %v56
    %98 = vmatprep.subr.mxu0 0.0
    %99 = vmatpush1.msra.mxu0 %v57
    %100 = vmatprep.subr.mxu0 0.0
    %101 = vmatpush1.msra.mxu0 %v58
    %102 = vmatprep.subr.mxu0 0.0
    %103 = vmatpush1.msra.mxu0 %v59
    %104 = vmatprep.subr.mxu0 0.0
    %105 = vmatpush1.msra.mxu0 %v60
    %106 = vmatprep.subr.mxu0 0.0
    %107 = vmatpush1.msra.mxu0 %v61
    %108 = vmatprep.subr.mxu0 0.0
    %109 = vmatpush1.msra.mxu0 %v62
    %110 = vmatprep.subr.mxu0 0.0
    %111 = vmatpush1.msra.mxu0 %v63
    %112 = vmatprep.subr.mxu0 0.0
    %113 = vmatpush1.msra.mxu0 %v64
    %114 = vmatprep.subr.mxu0 0.0
    %115 = vmatpush1.msra.mxu0 %v65
    %116 = vmatprep.subr.mxu0 0.0
    %117 = vmatpush1.msra.mxu0 %v66
    %118 = vmatprep.subr.mxu0 0.0
    %119 = vmatpush1.msra.mxu0 %v67
    %120 = vmatprep.subr.mxu0 0.0
    %121 = vmatpush1.msra.mxu0 %v68
    %122 = vmatprep.subr.mxu0 0.0
    %123 = vmatpush1.msra.mxu0 %v69
    %124 = vmatprep.subr.mxu0 0.0
    %125 = vmatpush1.msra.mxu0 0.0
    %126 = vmatprep.subr.mxu0 0.0
    %127 = vmatpush1.msra.mxu0 0.0
    %128 = vmatprep.subr.mxu0 0.0
    %129 = vmatpush1.msra.mxu0 0.0
    %130 = vmatprep.subr.mxu0 0.0
    %131 = vmatpush1.msra.mxu0 0.0
    %132 = vmatprep.subr.mxu0 0.0
    %133 = vmatpush1.msra.mxu0 0.0
    %134 = vmatprep.subr.mxu0 0.0
    %135 = vmatpush1.msra.mxu0 0.0
    %136 = vmatprep.subr.mxu0 0.0
    %137 = vmatpush1.msra.mxu0 0.0
    %138 = vmatprep.subr.mxu0 0.0
    %139 = vmatpush1.msra.mxu0 0.0
    %140 = vmatprep.subr.mxu0 0.0
    %141 = vmatpush1.msra.mxu0 0.0
    %142 = vmatprep.subr.mxu0 0.0
    %143 = vmatpush1.msra.mxu0 0.0
    %144 = vmatprep.subr.mxu0 0.0
    %145 = vmatpush1.msra.mxu0 0.0
    %146 = vmatprep.subr.mxu0 0.0
    %147 = vmatpush1.msra.mxu0 0.0
    %148 = vmatprep.subr.mxu0 0.0
    %149 = vmatpush1.msra.mxu0 0.0
    %150 = vmatprep.subr.mxu0 0.0
    %151 = vmatpush1.msra.mxu0 0.0
    %152 = vmatprep.subr.mxu0 0.0
    %153 = vmatpush1.msra.mxu0 0.0
    %154 = vmatprep.subr.mxu0 0.0
    %155 = vmatpush1.msra.mxu0 0.0
    %156 = vmatprep.mubr.f32.mxu0 0.0
    %157 = vmatmul.mubr.f32.gmra.mrb[0].mxu0 %v88
    %v158 = vpop.f32.mrb[0].mxu0
    %v159 = vadd.f32 %v90, %v158
    %v160 = vpop.f32.mrb[0].mxu0
    %161 = vdwg.mxu0
    %v162 = vadd.f32 %v91, %v159
    %v163 = vtanh.pop %v162
    %v164 = vmul.f32 %v89, 0.75
    %v166 = vlaneseq
    %v167 = vshrl.u32 %v166, 7
    %v168 = vsub.s32 0, %v167
    %v169 = vrot.slane %v86, %v168
    %171 = vmatprep.subr.mxu0 0.0
    %172 = vmatpush1.msra.mxu0 %v70
    %173 = vmatprep.subr.mxu0 0.0
    %174 = vmatpush1.msra.mxu0 %v71
    %175 = vmatprep.subr.mxu0 0.0
    %176 = vmatpush1.msra.mxu0 %v72
    %177 = vmatprep.subr.mxu0 0.0
    %178 = vmatpush1.msra.mxu0 %v73
    %179 = vmatprep.subr.mxu0 0.0
    %180 = vmatpush1.msra.mxu0 %v74
    %181 = vmatprep.subr.mxu0 0.0
    %182 = vmatpush1.msra.mxu0 %v75
    %183 = vmatprep.subr.mxu0 0.0
    %184 = vmatpush1.msra.mxu0 %v76
    %185 = vmatprep.subr.mxu0 0.0
    %186 = vmatpush1.msra.mxu0 %v77
    %187 = vmatprep.subr.mxu0 0.0
    %188 = vmatpush1.msra.mxu0 %v78
    %189 = vmatprep.subr.mxu0 0.0
    %190 = vmatpush1.msra.mxu0 %v79
    %191 = vmatprep.subr.mxu0 0.0
    %192 = vmatpush1.msra.mxu0 %v80
    %193 = vmatprep.subr.mxu0 0.0
    %194 = vmatpush1.msra.mxu0 %v81
    %195 = vmatprep.subr.mxu0 0.0
    %196 = vmatpush1.msra.mxu0 %v82
    %197 = vmatprep.subr.mxu0 0.0
    %198 = vmatpush1.msra.mxu0 %v83
    %199 = vmatprep.subr.mxu0 0.0
    %200 = vmatpush1.msra.mxu0 %v84
    %201 = vmatprep.subr.mxu0 0.0
    %202 = vmatpush1.msra.mxu0 %v85
    %203 = vmatprep.subr.mxu0 0.0
    %204 = vmatpush1.msra.mxu0 0.0
    %205 = vmatprep.subr.mxu0 0.0
    %206 = vmatpush1.msra.mxu0 0.0
    %207 = vmatprep.subr.mxu0 0.0
    %208 = vmatpush1.msra.mxu0 0.0
    %209 = vmatprep.subr.mxu0 0.0
    %210 = vmatpush1.msra.mxu0 0.0
    %211 = vmatprep.subr.mxu0 0.0
    %212 = vmatpush1.msra.mxu0 0.0
    %213 = vmatprep.subr.mxu0 0.0
    %214 = vmatpush1.msra.mxu0 0.0
    %215 = vmatprep.subr.mxu0 0.0
    %216 = vmatpush1.msra.mxu0 0.0
    %217 = vmatprep.subr.mxu0 0.0
    %218 = vmatpush1.msra.mxu0 0.0
    %219 = vmatprep.subr.mxu0 0.0
    %220 = vmatpush1.msra.mxu0 0.0
    %221 = vmatprep.subr.mxu0 0.0
    %222 = vmatpush1.msra.mxu0 0.0
    %223 = vmatprep.subr.mxu0 0.0
    %224 = vmatpush1.msra.mxu0 0.0
    %225 = vmatprep.subr.mxu0 0.0
    %226 = vmatpush1.msra.mxu0 0.0
    %227 = vmatprep.subr.mxu0 0.0
    %228 = vmatpush1.msra.mxu0 0.0
    %229 = vmatprep.subr.mxu0 0.0
    %230 = vmatpush1.msra.mxu0 0.0
    %231 = vmatprep.subr.mxu0 0.0
    %232 = vmatpush1.msra.mxu0 0.0
    %233 = vmatprep.subr.mxu0 0.0
    %234 = vmatpush1.msra.mxu0 0.0
    %235 = vmatprep.mubr.f32.mxu0 0.0
    %236 = vmatmul.mubr.f32.gmra.mrb[0].mxu0 %v163
    %v237 = vpop.f32.mrb[0].mxu0
    %v238 = vadd.f32 %v169, %v237
    %v239 = vpop.f32.mrb[0].mxu0
    %240 = vdwg.mxu0
    %v241 = vadd.f32 %v164, %v238
    %v242 = vtanh.pop %v241
    %243 = vst [vmem:[%s7] sm:$0xff] %v242
    %s244 = scalar_lea.vmem %s0, 8
    %v245 = vld [vmem:[%s244] sm:$0xff]
    %v246 = vmul.f32 %v162, 0.5
    %247 = vmatprep.subr.mxu0 0.0
    %248 = vmatpush1.msra.mxu0 %v54
    %249 = vmatprep.subr.mxu0 0.0
    %250 = vmatpush1.msra.mxu0 %v55
    %251 = vmatprep.subr.mxu0 0.0
    %252 = vmatpush1.msra.mxu0 %v56
    %253 = vmatprep.subr.mxu0 0.0
    %254 = vmatpush1.msra.mxu0 %v57
    %255 = vmatprep.subr.mxu0 0.0
    %256 = vmatpush1.msra.mxu0 %v58
    %257 = vmatprep.subr.mxu0 0.0
    %258 = vmatpush1.msra.mxu0 %v59
    %259 = vmatprep.subr.mxu0 0.0
    %260 = vmatpush1.msra.mxu0 %v60
    %261 = vmatprep.subr.mxu0 0.0
    %262 = vmatpush1.msra.mxu0 %v61
    %263 = vmatprep.subr.mxu0 0.0
    %264 = vmatpush1.msra.mxu0 %v62
    %265 = vmatprep.subr.mxu0 0.0
    %266 = vmatpush1.msra.mxu0 %v63
    %267 = vmatprep.subr.mxu0 0.0
    %268 = vmatpush1.msra.mxu0 %v64
    %269 = vmatprep.subr.mxu0 0.0
    %270 = vmatpush1.msra.mxu0 %v65
    %271 = vmatprep.subr.mxu0 0.0
    %272 = vmatpush1.msra.mxu0 %v66
    %273 = vmatprep.subr.mxu0 0.0
    %274 = vmatpush1.msra.mxu0 %v67
    %275 = vmatprep.subr.mxu0 0.0
    %276 = vmatpush1.msra.mxu0 %v68
    %277 = vmatprep.subr.mxu0 0.0
    %278 = vmatpush1.msra.mxu0 %v69
    %279 = vmatprep.subr.mxu0 0.0
    %280 = vmatpush1.msra.mxu0 0.0
    %281 = vmatprep.subr.mxu0 0.0
    %282 = vmatpush1.msra.mxu0 0.0
    %283 = vmatprep.subr.mxu0 0.0
    %284 = vmatpush1.msra.mxu0 0.0
    %285 = vmatprep.subr.mxu0 0.0
    %286 = vmatpush1.msra.mxu0 0.0
    %287 = vmatprep.subr.mxu0 0.0
    %288 = vmatpush1.msra.mxu0 0.0
    %289 = vmatprep.subr.mxu0 0.0
    %290 = vmatpush1.msra.mxu0 0.0
    %291 = vmatprep.subr.mxu0 0.0
    %292 = vmatpush1.msra.mxu0 0.0
    %293 = vmatprep.subr.mxu0 0.0
    %294 = vmatpush1.msra.mxu0 0.0
    %295 = vmatprep.subr.mxu0 0.0
    %296 = vmatpush1.msra.mxu0 0.0
    %297 = vmatprep.subr.mxu0 0.0
    %298 = vmatpush1.msra.mxu0 0.0
    %299 = vmatprep.subr.mxu0 0.0
    %300 = vmatpush1.msra.mxu0 0.0
    %301 = vmatprep.subr.mxu0 0.0
    %302 = vmatpush1.msra.mxu0 0.0
    %303 = vmatprep.subr.mxu0 0.0
    %304 = vmatpush1.msra.mxu0 0.0
    %305 = vmatprep.subr.mxu0 0.0
    %306 = vmatpush1.msra.mxu0 0.0
    %307 = vmatprep.subr.mxu0 0.0
    %308 = vmatpush1.msra.mxu0 0.0
    %309 = vmatprep.subr.mxu0 0.0
    %310 = vmatpush1.msra.mxu0 0.0
    %311 = vmatprep.mubr.f32.mxu0 0.0
    %312 = vmatmul.mubr.f32.gmra.mrb[0].mxu0 %v163
    %v313 = vpop.f32.mrb[0].mxu0
    %v314 = vadd.f32 %v245, %v313
    %v315 = vpop.f32.mrb[0].mxu0
    %316 = vdwg.mxu0
    %v317 = vadd.f32 %v246, %v314
    %v318 = vtanh.pop %v317
    %v319 = vmul.f32 %v241, 0.75
    %320 = vmatprep.subr.mxu0 0.0
    %321 = vmatpush1.msra.mxu0 %v70
    %322 = vmatprep.subr.mxu0 0.0
    %323 = vmatpush1.msra.mxu0 %v71
    %324 = vmatprep.subr.mxu0 0.0
    %325 = vmatpush1.msra.mxu0 %v72
    %326 = vmatprep.subr.mxu0 0.0
    %327 = vmatpush1.msra.mxu0 %v73
    %328 = vmatprep.subr.mxu0 0.0
    %329 = vmatpush1.msra.mxu0 %v74
    %330 = vmatprep.subr.mxu0 0.0
    %331 = vmatpush1.msra.mxu0 %v75
    %332 = vmatprep.subr.mxu0 0.0
    %333 = vmatpush1.msra.mxu0 %v76
    %334 = vmatprep.subr.mxu0 0.0
    %335 = vmatpush1.msra.mxu0 %v77
    %336 = vmatprep.subr.mxu0 0.0
    %337 = vmatpush1.msra.mxu0 %v78
    %338 = vmatprep.subr.mxu0 0.0
    %339 = vmatpush1.msra.mxu0 %v79
    %340 = vmatprep.subr.mxu0 0.0
    %341 = vmatpush1.msra.mxu0 %v80
    %342 = vmatprep.subr.mxu0 0.0
    %343 = vmatpush1.msra.mxu0 %v81
    %344 = vmatprep.subr.mxu0 0.0
    %345 = vmatpush1.msra.mxu0 %v82
    %346 = vmatprep.subr.mxu0 0.0
    %347 = vmatpush1.msra.mxu0 %v83
    %348 = vmatprep.subr.mxu0 0.0
    %349 = vmatpush1.msra.mxu0 %v84
    %350 = vmatprep.subr.mxu0 0.0
    %351 = vmatpush1.msra.mxu0 %v85
    %352 = vmatprep.subr.mxu0 0.0
    %353 = vmatpush1.msra.mxu0 0.0
    %354 = vmatprep.subr.mxu0 0.0
    %355 = vmatpush1.msra.mxu0 0.0
    %356 = vmatprep.subr.mxu0 0.0
    %357 = vmatpush1.msra.mxu0 0.0
    %358 = vmatprep.subr.mxu0 0.0
    %359 = vmatpush1.msra.mxu0 0.0
    %360 = vmatprep.subr.mxu0 0.0
    %361 = vmatpush1.msra.mxu0 0.0
    %362 = vmatprep.subr.mxu0 0.0
    %363 = vmatpush1.msra.mxu0 0.0
    %364 = vmatprep.subr.mxu0 0.0
    %365 = vmatpush1.msra.mxu0 0.0
    %366 = vmatprep.subr.mxu0 0.0
    %367 = vmatpush1.msra.mxu0 0.0
    %368 = vmatprep.subr.mxu0 0.0
    %369 = vmatpush1.msra.mxu0 0.0
    %370 = vmatprep.subr.mxu0 0.0
    %371 = vmatpush1.msra.mxu0 0.0
    %372 = vmatprep.subr.mxu0 0.0
    %373 = vmatpush1.msra.mxu0 0.0
    %374 = vmatprep.subr.mxu0 0.0
    %375 = vmatpush1.msra.mxu0 0.0
    %376 = vmatprep.subr.mxu0 0.0
    %377 = vmatpush1.msra.mxu0 0.0
    %378 = vmatprep.subr.mxu0 0.0
    %379 = vmatpush1.msra.mxu0 0.0
    %380 = vmatprep.subr.mxu0 0.0
    %381 = vmatpush1.msra.mxu0 0.0
    %382 = vmatprep.subr.mxu0 0.0
    %383 = vmatpush1.msra.mxu0 0.0
    %384 = vmatprep.mubr.f32.mxu0 0.0
    %385 = vmatmul.mubr.f32.gmra.mrb[0].mxu0 %v318
    %v386 = vpop.f32.mrb[0].mxu0
    %v387 = vadd.f32 %v169, %v386
    %v388 = vpop.f32.mrb[0].mxu0
    %389 = vdwg.mxu0
    %v390 = vadd.f32 %v319, %v387
    %v391 = vtanh.pop %v390
    %s392 = scalar_lea.vmem %s7, 8
    %393 = vst [vmem:[%s392] sm:$0xff] %v391
    %s394 = scalar_lea.vmem %s0, 16
    %v395 = vld [vmem:[%s394] sm:$0xff]
    %v396 = vmul.f32 %v317, 0.5
    %397 = vmatprep.subr.mxu0 0.0
    %398 = vmatpush1.msra.mxu0 %v54
    %399 = vmatprep.subr.mxu0 0.0
    %400 = vmatpush1.msra.mxu0 %v55
    %401 = vmatprep.subr.mxu0 0.0
    %402 = vmatpush1.msra.mxu0 %v56
    %403 = vmatprep.subr.mxu0 0.0
    %404 = vmatpush1.msra.mxu0 %v57
    %405 = vmatprep.subr.mxu0 0.0
    %406 = vmatpush1.msra.mxu0 %v58
    %407 = vmatprep.subr.mxu0 0.0
    %408 = vmatpush1.msra.mxu0 %v59
    %409 = vmatprep.subr.mxu0 0.0
    %410 = vmatpush1.msra.mxu0 %v60
    %411 = vmatprep.subr.mxu0 0.0
    %412 = vmatpush1.msra.mxu0 %v61
    %413 = vmatprep.subr.mxu0 0.0
    %414 = vmatpush1.msra.mxu0 %v62
    %415 = vmatprep.subr.mxu0 0.0
    %416 = vmatpush1.msra.mxu0 %v63
    %417 = vmatprep.subr.mxu0 0.0
    %418 = vmatpush1.msra.mxu0 %v64
    %419 = vmatprep.subr.mxu0 0.0
    %420 = vmatpush1.msra.mxu0 %v65
    %421 = vmatprep.subr.mxu0 0.0
    %422 = vmatpush1.msra.mxu0 %v66
    %423 = vmatprep.subr.mxu0 0.0
    %424 = vmatpush1.msra.mxu0 %v67
    %425 = vmatprep.subr.mxu0 0.0
    %426 = vmatpush1.msra.mxu0 %v68
    %427 = vmatprep.subr.mxu0 0.0
    %428 = vmatpush1.msra.mxu0 %v69
    %429 = vmatprep.subr.mxu0 0.0
    %430 = vmatpush1.msra.mxu0 0.0
    %431 = vmatprep.subr.mxu0 0.0
    %432 = vmatpush1.msra.mxu0 0.0
    %433 = vmatprep.subr.mxu0 0.0
    %434 = vmatpush1.msra.mxu0 0.0
    %435 = vmatprep.subr.mxu0 0.0
    %436 = vmatpush1.msra.mxu0 0.0
    %437 = vmatprep.subr.mxu0 0.0
    %438 = vmatpush1.msra.mxu0 0.0
    %439 = vmatprep.subr.mxu0 0.0
    %440 = vmatpush1.msra.mxu0 0.0
    %441 = vmatprep.subr.mxu0 0.0
    %442 = vmatpush1.msra.mxu0 0.0
    %443 = vmatprep.subr.mxu0 0.0
    %444 = vmatpush1.msra.mxu0 0.0
    %445 = vmatprep.subr.mxu0 0.0
    %446 = vmatpush1.msra.mxu0 0.0
    %447 = vmatprep.subr.mxu0 0.0
    %448 = vmatpush1.msra.mxu0 0.0
    %449 = vmatprep.subr.mxu0 0.0
    %450 = vmatpush1.msra.mxu0 0.0
    %451 = vmatprep.subr.mxu0 0.0
    %452 = vmatpush1.msra.mxu0 0.0
    %453 = vmatprep.subr.mxu0 0.0
    %454 = vmatpush1.msra.mxu0 0.0
    %455 = vmatprep.subr.mxu0 0.0
    %456 = vmatpush1.msra.mxu0 0.0
    %457 = vmatprep.subr.mxu0 0.0
    %458 = vmatpush1.msra.mxu0 0.0
    %459 = vmatprep.subr.mxu0 0.0
    %460 = vmatpush1.msra.mxu0 0.0
    %461 = vmatprep.mubr.f32.mxu0 0.0
    %462 = vmatmul.mubr.f32.gmra.mrb[0].mxu0 %v318
    %v463 = vpop.f32.mrb[0].mxu0
    %v464 = vadd.f32 %v395, %v463
    %v465 = vpop.f32.mrb[0].mxu0
    %466 = vdwg.mxu0
    %v467 = vadd.f32 %v396, %v464
    %v468 = vtanh.pop %v467
    %v469 = vmul.f32 %v390, 0.75
    %470 = vmatprep.subr.mxu0 0.0
    %471 = vmatpush1.msra.mxu0 %v70
    %472 = vmatprep.subr.mxu0 0.0
    %473 = vmatpush1.msra.mxu0 %v71
    %474 = vmatprep.subr.mxu0 0.0
    %475 = vmatpush1.msra.mxu0 %v72
    %476 = vmatprep.subr.mxu0 0.0
    %477 = vmatpush1.msra.mxu0 %v73
    %478 = vmatprep.subr.mxu0 0.0
    %479 = vmatpush1.msra.mxu0 %v74
    %480 = vmatprep.subr.mxu0 0.0
    %481 = vmatpush1.msra.mxu0 %v75
    %482 = vmatprep.subr.mxu0 0.0
    %483 = vmatpush1.msra.mxu0 %v76
    %484 = vmatprep.subr.mxu0 0.0
    %485 = vmatpush1.msra.mxu0 %v77
    %486 = vmatprep.subr.mxu0 0.0
    %487 = vmatpush1.msra.mxu0 %v78
    %488 = vmatprep.subr.mxu0 0.0
    %489 = vmatpush1.msra.mxu0 %v79
    %490 = vmatprep.subr.mxu0 0.0
    %491 = vmatpush1.msra.mxu0 %v80
    %492 = vmatprep.subr.mxu0 0.0
    %493 = vmatpush1.msra.mxu0 %v81
    %494 = vmatprep.subr.mxu0 0.0
    %495 = vmatpush1.msra.mxu0 %v82
    %496 = vmatprep.subr.mxu0 0.0
    %497 = vmatpush1.msra.mxu0 %v83
    %498 = vmatprep.subr.mxu0 0.0
    %499 = vmatpush1.msra.mxu0 %v84
    %500 = vmatprep.subr.mxu0 0.0
    %501 = vmatpush1.msra.mxu0 %v85
    %502 = vmatprep.subr.mxu0 0.0
    %503 = vmatpush1.msra.mxu0 0.0
    %504 = vmatprep.subr.mxu0 0.0
    %505 = vmatpush1.msra.mxu0 0.0
    %506 = vmatprep.subr.mxu0 0.0
    %507 = vmatpush1.msra.mxu0 0.0
    %508 = vmatprep.subr.mxu0 0.0
    %509 = vmatpush1.msra.mxu0 0.0
    %510 = vmatprep.subr.mxu0 0.0
    %511 = vmatpush1.msra.mxu0 0.0
    %512 = vmatprep.subr.mxu0 0.0
    %513 = vmatpush1.msra.mxu0 0.0
    %514 = vmatprep.subr.mxu0 0.0
    %515 = vmatpush1.msra.mxu0 0.0
    %516 = vmatprep.subr.mxu0 0.0
    %517 = vmatpush1.msra.mxu0 0.0
    %518 = vmatprep.subr.mxu0 0.0
    %519 = vmatpush1.msra.mxu0 0.0
    %520 = vmatprep.subr.mxu0 0.0
    %521 = vmatpush1.msra.mxu0 0.0
    %522 = vmatprep.subr.mxu0 0.0
    %523 = vmatpush1.msra.mxu0 0.0
    %524 = vmatprep.subr.mxu0 0.0
    %525 = vmatpush1.msra.mxu0 0.0
    %526 = vmatprep.subr.mxu0 0.0
    %527 = vmatpush1.msra.mxu0 0.0
    %528 = vmatprep.subr.mxu0 0.0
    %529 = vmatpush1.msra.mxu0 0.0
    %530 = vmatprep.subr.mxu0 0.0
    %531 = vmatpush1.msra.mxu0 0.0
    %532 = vmatprep.subr.mxu0 0.0
    %533 = vmatpush1.msra.mxu0 0.0
    %534 = vmatprep.mubr.f32.mxu0 0.0
    %535 = vmatmul.mubr.f32.gmra.mrb[0].mxu0 %v468
    %v536 = vpop.f32.mrb[0].mxu0
    %v537 = vadd.f32 %v169, %v536
    %v538 = vpop.f32.mrb[0].mxu0
    %539 = vdwg.mxu0
    %v540 = vadd.f32 %v469, %v537
    %v541 = vtanh.pop %v540
    %s542 = scalar_lea.vmem %s7, 16
    %543 = vst [vmem:[%s542] sm:$0xff] %v541
    %s544 = scalar_lea.vmem %s0, 24
    %v545 = vld [vmem:[%s544] sm:$0xff]
    %v546 = vmul.f32 %v467, 0.5
    %547 = vmatprep.subr.mxu0 0.0
    %548 = vmatpush1.msra.mxu0 %v54
    %549 = vmatprep.subr.mxu0 0.0
    %550 = vmatpush1.msra.mxu0 %v55
    %551 = vmatprep.subr.mxu0 0.0
    %552 = vmatpush1.msra.mxu0 %v56
    %553 = vmatprep.subr.mxu0 0.0
    %554 = vmatpush1.msra.mxu0 %v57
    %555 = vmatprep.subr.mxu0 0.0
    %556 = vmatpush1.msra.mxu0 %v58
    %557 = vmatprep.subr.mxu0 0.0
    %558 = vmatpush1.msra.mxu0 %v59
    %559 = vmatprep.subr.mxu0 0.0
    %560 = vmatpush1.msra.mxu0 %v60
    %561 = vmatprep.subr.mxu0 0.0
    %562 = vmatpush1.msra.mxu0 %v61
    %563 = vmatprep.subr.mxu0 0.0
    %564 = vmatpush1.msra.mxu0 %v62
    %565 = vmatprep.subr.mxu0 0.0
    %566 = vmatpush1.msra.mxu0 %v63
    %567 = vmatprep.subr.mxu0 0.0
    %568 = vmatpush1.msra.mxu0 %v64
    %569 = vmatprep.subr.mxu0 0.0
    %570 = vmatpush1.msra.mxu0 %v65
    %571 = vmatprep.subr.mxu0 0.0
    %572 = vmatpush1.msra.mxu0 %v66
    %573 = vmatprep.subr.mxu0 0.0
    %574 = vmatpush1.msra.mxu0 %v67
    %575 = vmatprep.subr.mxu0 0.0
    %576 = vmatpush1.msra.mxu0 %v68
    %577 = vmatprep.subr.mxu0 0.0
    %578 = vmatpush1.msra.mxu0 %v69
    %579 = vmatprep.subr.mxu0 0.0
    %580 = vmatpush1.msra.mxu0 0.0
    %581 = vmatprep.subr.mxu0 0.0
    %582 = vmatpush1.msra.mxu0 0.0
    %583 = vmatprep.subr.mxu0 0.0
    %584 = vmatpush1.msra.mxu0 0.0
    %585 = vmatprep.subr.mxu0 0.0
    %586 = vmatpush1.msra.mxu0 0.0
    %587 = vmatprep.subr.mxu0 0.0
    %588 = vmatpush1.msra.mxu0 0.0
    %589 = vmatprep.subr.mxu0 0.0
    %590 = vmatpush1.msra.mxu0 0.0
    %591 = vmatprep.subr.mxu0 0.0
    %592 = vmatpush1.msra.mxu0 0.0
    %593 = vmatprep.subr.mxu0 0.0
    %594 = vmatpush1.msra.mxu0 0.0
    %595 = vmatprep.subr.mxu0 0.0
    %596 = vmatpush1.msra.mxu0 0.0
    %597 = vmatprep.subr.mxu0 0.0
    %598 = vmatpush1.msra.mxu0 0.0
    %599 = vmatprep.subr.mxu0 0.0
    %600 = vmatpush1.msra.mxu0 0.0
    %601 = vmatprep.subr.mxu0 0.0
    %602 = vmatpush1.msra.mxu0 0.0
    %603 = vmatprep.subr.mxu0 0.0
    %604 = vmatpush1.msra.mxu0 0.0
    %605 = vmatprep.subr.mxu0 0.0
    %606 = vmatpush1.msra.mxu0 0.0
    %607 = vmatprep.subr.mxu0 0.0
    %608 = vmatpush1.msra.mxu0 0.0
    %609 = vmatprep.subr.mxu0 0.0
    %610 = vmatpush1.msra.mxu0 0.0
    %611 = vmatprep.mubr.f32.mxu0 0.0
    %612 = vmatmul.mubr.f32.gmra.mrb[0].mxu0 %v468
    %v613 = vpop.f32.mrb[0].mxu0
    %v614 = vadd.f32 %v545, %v613
    %v615 = vpop.f32.mrb[0].mxu0
    %616 = vdwg.mxu0
    %v617 = vadd.f32 %v546, %v614
    %v618 = vtanh.pop %v617
    %v619 = vmul.f32 %v540, 0.75
    %620 = vmatprep.subr.mxu0 0.0
    %621 = vmatpush1.msra.mxu0 %v70
    %622 = vmatprep.subr.mxu0 0.0
    %623 = vmatpush1.msra.mxu0 %v71
    %624 = vmatprep.subr.mxu0 0.0
    %625 = vmatpush1.msra.mxu0 %v72
    %626 = vmatprep.subr.mxu0 0.0
    %627 = vmatpush1.msra.mxu0 %v73
    %628 = vmatprep.subr.mxu0 0.0
    %629 = vmatpush1.msra.mxu0 %v74
    %630 = vmatprep.subr.mxu0 0.0
    %631 = vmatpush1.msra.mxu0 %v75
    %632 = vmatprep.subr.mxu0 0.0
    %633 = vmatpush1.msra.mxu0 %v76
    %634 = vmatprep.subr.mxu0 0.0
    %635 = vmatpush1.msra.mxu0 %v77
    %636 = vmatprep.subr.mxu0 0.0
    %637 = vmatpush1.msra.mxu0 %v78
    %638 = vmatprep.subr.mxu0 0.0
    %639 = vmatpush1.msra.mxu0 %v79
    %640 = vmatprep.subr.mxu0 0.0
    %641 = vmatpush1.msra.mxu0 %v80
    %642 = vmatprep.subr.mxu0 0.0
    %643 = vmatpush1.msra.mxu0 %v81
    %644 = vmatprep.subr.mxu0 0.0
    %645 = vmatpush1.msra.mxu0 %v82
    %646 = vmatprep.subr.mxu0 0.0
    %647 = vmatpush1.msra.mxu0 %v83
    %648 = vmatprep.subr.mxu0 0.0
    %649 = vmatpush1.msra.mxu0 %v84
    %650 = vmatprep.subr.mxu0 0.0
    %651 = vmatpush1.msra.mxu0 %v85
    %652 = vmatprep.subr.mxu0 0.0
    %653 = vmatpush1.msra.mxu0 0.0
    %654 = vmatprep.subr.mxu0 0.0
    %655 = vmatpush1.msra.mxu0 0.0
    %656 = vmatprep.subr.mxu0 0.0
    %657 = vmatpush1.msra.mxu0 0.0
    %658 = vmatprep.subr.mxu0 0.0
    %659 = vmatpush1.msra.mxu0 0.0
    %660 = vmatprep.subr.mxu0 0.0
    %661 = vmatpush1.msra.mxu0 0.0
    %662 = vmatprep.subr.mxu0 0.0
    %663 = vmatpush1.msra.mxu0 0.0
    %664 = vmatprep.subr.mxu0 0.0
    %665 = vmatpush1.msra.mxu0 0.0
    %666 = vmatprep.subr.mxu0 0.0
    %667 = vmatpush1.msra.mxu0 0.0
    %668 = vmatprep.subr.mxu0 0.0
    %669 = vmatpush1.msra.mxu0 0.0
    %670 = vmatprep.subr.mxu0 0.0
    %671 = vmatpush1.msra.mxu0 0.0
    %672 = vmatprep.subr.mxu0 0.0
    %673 = vmatpush1.msra.mxu0 0.0
    %674 = vmatprep.subr.mxu0 0.0
    %675 = vmatpush1.msra.mxu0 0.0
    %676 = vmatprep.subr.mxu0 0.0
    %677 = vmatpush1.msra.mxu0 0.0
    %678 = vmatprep.subr.mxu0 0.0
    %679 = vmatpush1.msra.mxu0 0.0
    %680 = vmatprep.subr.mxu0 0.0
    %681 = vmatpush1.msra.mxu0 0.0
    %682 = vmatprep.subr.mxu0 0.0
    %683 = vmatpush1.msra.mxu0 0.0
    %684 = vmatprep.mubr.f32.mxu0 0.0
    %685 = vmatmul.mubr.f32.gmra.mrb[0].mxu0 %v618
    %v686 = vpop.f32.mrb[0].mxu0
    %v687 = vadd.f32 %v169, %v686
    %v688 = vpop.f32.mrb[0].mxu0
    %689 = vdwg.mxu0
    %v690 = vadd.f32 %v619, %v687
    %v691 = vtanh.pop %v690
    %s692 = scalar_lea.vmem %s7, 24
    %693 = vst [vmem:[%s692] sm:$0xff] %v691
    %s694 = scalar_lea.vmem %s0, 32
    %v695 = vld [vmem:[%s694] sm:$0xff]
    %v696 = vmul.f32 %v617, 0.5
    %697 = vmatprep.subr.mxu0 0.0
    %698 = vmatpush1.msra.mxu0 %v54
    %699 = vmatprep.subr.mxu0 0.0
    %700 = vmatpush1.msra.mxu0 %v55
    %701 = vmatprep.subr.mxu0 0.0
    %702 = vmatpush1.msra.mxu0 %v56
    %703 = vmatprep.subr.mxu0 0.0
    %704 = vmatpush1.msra.mxu0 %v57
    %705 = vmatprep.subr.mxu0 0.0
    %706 = vmatpush1.msra.mxu0 %v58
    %707 = vmatprep.subr.mxu0 0.0
    %708 = vmatpush1.msra.mxu0 %v59
    %709 = vmatprep.subr.mxu0 0.0
    %710 = vmatpush1.msra.mxu0 %v60
    %711 = vmatprep.subr.mxu0 0.0
    %712 = vmatpush1.msra.mxu0 %v61
    %713 = vmatprep.subr.mxu0 0.0
    %714 = vmatpush1.msra.mxu0 %v62
    %715 = vmatprep.subr.mxu0 0.0
    %716 = vmatpush1.msra.mxu0 %v63
    %717 = vmatprep.subr.mxu0 0.0
    %718 = vmatpush1.msra.mxu0 %v64
    %719 = vmatprep.subr.mxu0 0.0
    %720 = vmatpush1.msra.mxu0 %v65
    %721 = vmatprep.subr.mxu0 0.0
    %722 = vmatpush1.msra.mxu0 %v66
    %723 = vmatprep.subr.mxu0 0.0
    %724 = vmatpush1.msra.mxu0 %v67
    %725 = vmatprep.subr.mxu0 0.0
    %726 = vmatpush1.msra.mxu0 %v68
    %727 = vmatprep.subr.mxu0 0.0
    %728 = vmatpush1.msra.mxu0 %v69
    %729 = vmatprep.subr.mxu0 0.0
    %730 = vmatpush1.msra.mxu0 0.0
    %731 = vmatprep.subr.mxu0 0.0
    %732 = vmatpush1.msra.mxu0 0.0
    %733 = vmatprep.subr.mxu0 0.0
    %734 = vmatpush1.msra.mxu0 0.0
    %735 = vmatprep.subr.mxu0 0.0
    %736 = vmatpush1.msra.mxu0 0.0
    %737 = vmatprep.subr.mxu0 0.0
    %738 = vmatpush1.msra.mxu0 0.0
    %739 = vmatprep.subr.mxu0 0.0
    %740 = vmatpush1.msra.mxu0 0.0
    %741 = vmatprep.subr.mxu0 0.0
    %742 = vmatpush1.msra.mxu0 0.0
    %743 = vmatprep.subr.mxu0 0.0
    %744 = vmatpush1.msra.mxu0 0.0
    %745 = vmatprep.subr.mxu0 0.0
    %746 = vmatpush1.msra.mxu0 0.0
    %747 = vmatprep.subr.mxu0 0.0
    %748 = vmatpush1.msra.mxu0 0.0
    %749 = vmatprep.subr.mxu0 0.0
    %750 = vmatpush1.msra.mxu0 0.0
    %751 = vmatprep.subr.mxu0 0.0
    %752 = vmatpush1.msra.mxu0 0.0
    %753 = vmatprep.subr.mxu0 0.0
    %754 = vmatpush1.msra.mxu0 0.0
    %755 = vmatprep.subr.mxu0 0.0
    %756 = vmatpush1.msra.mxu0 0.0
    %757 = vmatprep.subr.mxu0 0.0
    %758 = vmatpush1.msra.mxu0 0.0
    %759 = vmatprep.subr.mxu0 0.0
    %760 = vmatpush1.msra.mxu0 0.0
    %761 = vmatprep.mubr.f32.mxu0 0.0
    %762 = vmatmul.mubr.f32.gmra.mrb[0].mxu0 %v618
    %v763 = vpop.f32.mrb[0].mxu0
    %v764 = vadd.f32 %v695, %v763
    %v765 = vpop.f32.mrb[0].mxu0
    %766 = vdwg.mxu0
    %v767 = vadd.f32 %v696, %v764
    %v768 = vtanh.pop %v767
    %v769 = vmul.f32 %v690, 0.75
    %770 = vmatprep.subr.mxu0 0.0
    %771 = vmatpush1.msra.mxu0 %v70
    %772 = vmatprep.subr.mxu0 0.0
    %773 = vmatpush1.msra.mxu0 %v71
    %774 = vmatprep.subr.mxu0 0.0
    %775 = vmatpush1.msra.mxu0 %v72
    %776 = vmatprep.subr.mxu0 0.0
    %777 = vmatpush1.msra.mxu0 %v73
    %778 = vmatprep.subr.mxu0 0.0
    %779 = vmatpush1.msra.mxu0 %v74
    %780 = vmatprep.subr.mxu0 0.0
    %781 = vmatpush1.msra.mxu0 %v75
    %782 = vmatprep.subr.mxu0 0.0
    %783 = vmatpush1.msra.mxu0 %v76
    %784 = vmatprep.subr.mxu0 0.0
    %785 = vmatpush1.msra.mxu0 %v77
    %786 = vmatprep.subr.mxu0 0.0
    %787 = vmatpush1.msra.mxu0 %v78
    %788 = vmatprep.subr.mxu0 0.0
    %789 = vmatpush1.msra.mxu0 %v79
    %790 = vmatprep.subr.mxu0 0.0
    %791 = vmatpush1.msra.mxu0 %v80
    %792 = vmatprep.subr.mxu0 0.0
    %793 = vmatpush1.msra.mxu0 %v81
    %794 = vmatprep.subr.mxu0 0.0
    %795 = vmatpush1.msra.mxu0 %v82
    %796 = vmatprep.subr.mxu0 0.0
    %797 = vmatpush1.msra.mxu0 %v83
    %798 = vmatprep.subr.mxu0 0.0
    %799 = vmatpush1.msra.mxu0 %v84
    %800 = vmatprep.subr.mxu0 0.0
    %801 = vmatpush1.msra.mxu0 %v85
    %802 = vmatprep.subr.mxu0 0.0
    %803 = vmatpush1.msra.mxu0 0.0
    %804 = vmatprep.subr.mxu0 0.0
    %805 = vmatpush1.msra.mxu0 0.0
    %806 = vmatprep.subr.mxu0 0.0
    %807 = vmatpush1.msra.mxu0 0.0
    %808 = vmatprep.subr.mxu0 0.0
    %809 = vmatpush1.msra.mxu0 0.0
    %810 = vmatprep.subr.mxu0 0.0
    %811 = vmatpush1.msra.mxu0 0.0
    %812 = vmatprep.subr.mxu0 0.0
    %813 = vmatpush1.msra.mxu0 0.0
    %814 = vmatprep.subr.mxu0 0.0
    %815 = vmatpush1.msra.mxu0 0.0
    %816 = vmatprep.subr.mxu0 0.0
    %817 = vmatpush1.msra.mxu0 0.0
    %818 = vmatprep.subr.mxu0 0.0
    %819 = vmatpush1.msra.mxu0 0.0
    %820 = vmatprep.subr.mxu0 0.0
    %821 = vmatpush1.msra.mxu0 0.0
    %822 = vmatprep.subr.mxu0 0.0
    %823 = vmatpush1.msra.mxu0 0.0
    %824 = vmatprep.subr.mxu0 0.0
    %825 = vmatpush1.msra.mxu0 0.0
    %826 = vmatprep.subr.mxu0 0.0
    %827 = vmatpush1.msra.mxu0 0.0
    %828 = vmatprep.subr.mxu0 0.0
    %829 = vmatpush1.msra.mxu0 0.0
    %830 = vmatprep.subr.mxu0 0.0
    %831 = vmatpush1.msra.mxu0 0.0
    %832 = vmatprep.subr.mxu0 0.0
    %833 = vmatpush1.msra.mxu0 0.0
    %834 = vmatprep.mubr.f32.mxu0 0.0
    %835 = vmatmul.mubr.f32.gmra.mrb[0].mxu0 %v768
    %v836 = vpop.f32.mrb[0].mxu0
    %v837 = vadd.f32 %v169, %v836
    %v838 = vpop.f32.mrb[0].mxu0
    %839 = vdwg.mxu0
    %v840 = vadd.f32 %v769, %v837
    %v841 = vtanh.pop %v840
    %s842 = scalar_lea.vmem %s7, 32
    %843 = vst [vmem:[%s842] sm:$0xff] %v841
    %s844 = scalar_lea.vmem %s0, 40
    %v845 = vld [vmem:[%s844] sm:$0xff]
    %v846 = vmul.f32 %v767, 0.5
    %847 = vmatprep.subr.mxu0 0.0
    %848 = vmatpush1.msra.mxu0 %v54
    %849 = vmatprep.subr.mxu0 0.0
    %850 = vmatpush1.msra.mxu0 %v55
    %851 = vmatprep.subr.mxu0 0.0
    %852 = vmatpush1.msra.mxu0 %v56
    %853 = vmatprep.subr.mxu0 0.0
    %854 = vmatpush1.msra.mxu0 %v57
    %855 = vmatprep.subr.mxu0 0.0
    %856 = vmatpush1.msra.mxu0 %v58
    %857 = vmatprep.subr.mxu0 0.0
    %858 = vmatpush1.msra.mxu0 %v59
    %859 = vmatprep.subr.mxu0 0.0
    %860 = vmatpush1.msra.mxu0 %v60
    %861 = vmatprep.subr.mxu0 0.0
    %862 = vmatpush1.msra.mxu0 %v61
    %863 = vmatprep.subr.mxu0 0.0
    %864 = vmatpush1.msra.mxu0 %v62
    %865 = vmatprep.subr.mxu0 0.0
    %866 = vmatpush1.msra.mxu0 %v63
    %867 = vmatprep.subr.mxu0 0.0
    %868 = vmatpush1.msra.mxu0 %v64
    %869 = vmatprep.subr.mxu0 0.0
    %870 = vmatpush1.msra.mxu0 %v65
    %871 = vmatprep.subr.mxu0 0.0
    %872 = vmatpush1.msra.mxu0 %v66
    %873 = vmatprep.subr.mxu0 0.0
    %874 = vmatpush1.msra.mxu0 %v67
    %875 = vmatprep.subr.mxu0 0.0
    %876 = vmatpush1.msra.mxu0 %v68
    %877 = vmatprep.subr.mxu0 0.0
    %878 = vmatpush1.msra.mxu0 %v69
    %879 = vmatprep.subr.mxu0 0.0
    %880 = vmatpush1.msra.mxu0 0.0
    %881 = vmatprep.subr.mxu0 0.0
    %882 = vmatpush1.msra.mxu0 0.0
    %883 = vmatprep.subr.mxu0 0.0
    %884 = vmatpush1.msra.mxu0 0.0
    %885 = vmatprep.subr.mxu0 0.0
    %886 = vmatpush1.msra.mxu0 0.0
    %887 = vmatprep.subr.mxu0 0.0
    %888 = vmatpush1.msra.mxu0 0.0
    %889 = vmatprep.subr.mxu0 0.0
    %890 = vmatpush1.msra.mxu0 0.0
    %891 = vmatprep.subr.mxu0 0.0
    %892 = vmatpush1.msra.mxu0 0.0
    %893 = vmatprep.subr.mxu0 0.0
    %894 = vmatpush1.msra.mxu0 0.0
    %895 = vmatprep.subr.mxu0 0.0
    %896 = vmatpush1.msra.mxu0 0.0
    %897 = vmatprep.subr.mxu0 0.0
    %898 = vmatpush1.msra.mxu0 0.0
    %899 = vmatprep.subr.mxu0 0.0
    %900 = vmatpush1.msra.mxu0 0.0
    %901 = vmatprep.subr.mxu0 0.0
    %902 = vmatpush1.msra.mxu0 0.0
    %903 = vmatprep.subr.mxu0 0.0
    %904 = vmatpush1.msra.mxu0 0.0
    %905 = vmatprep.subr.mxu0 0.0
    %906 = vmatpush1.msra.mxu0 0.0
    %907 = vmatprep.subr.mxu0 0.0
    %908 = vmatpush1.msra.mxu0 0.0
    %909 = vmatprep.subr.mxu0 0.0
    %910 = vmatpush1.msra.mxu0 0.0
    %911 = vmatprep.mubr.f32.mxu0 0.0
    %912 = vmatmul.mubr.f32.gmra.mrb[0].mxu0 %v768
    %v913 = vpop.f32.mrb[0].mxu0
    %v914 = vadd.f32 %v845, %v913
    %v915 = vpop.f32.mrb[0].mxu0
    %916 = vdwg.mxu0
    %v917 = vadd.f32 %v846, %v914
    %v918 = vtanh.pop %v917
    %v919 = vmul.f32 %v840, 0.75
    %920 = vmatprep.subr.mxu0 0.0
    %921 = vmatpush1.msra.mxu0 %v70
    %922 = vmatprep.subr.mxu0 0.0
    %923 = vmatpush1.msra.mxu0 %v71
    %924 = vmatprep.subr.mxu0 0.0
    %925 = vmatpush1.msra.mxu0 %v72
    %926 = vmatprep.subr.mxu0 0.0
    %927 = vmatpush1.msra.mxu0 %v73
    %928 = vmatprep.subr.mxu0 0.0
    %929 = vmatpush1.msra.mxu0 %v74
    %930 = vmatprep.subr.mxu0 0.0
    %931 = vmatpush1.msra.mxu0 %v75
    %932 = vmatprep.subr.mxu0 0.0
    %933 = vmatpush1.msra.mxu0 %v76
    %934 = vmatprep.subr.mxu0 0.0
    %935 = vmatpush1.msra.mxu0 %v77
    %936 = vmatprep.subr.mxu0 0.0
    %937 = vmatpush1.msra.mxu0 %v78
    %938 = vmatprep.subr.mxu0 0.0
    %939 = vmatpush1.msra.mxu0 %v79
    %940 = vmatprep.subr.mxu0 0.0
    %941 = vmatpush1.msra.mxu0 %v80
    %942 = vmatprep.subr.mxu0 0.0
    %943 = vmatpush1.msra.mxu0 %v81
    %944 = vmatprep.subr.mxu0 0.0
    %945 = vmatpush1.msra.mxu0 %v82
    %946 = vmatprep.subr.mxu0 0.0
    %947 = vmatpush1.msra.mxu0 %v83
    %948 = vmatprep.subr.mxu0 0.0
    %949 = vmatpush1.msra.mxu0 %v84
    %950 = vmatprep.subr.mxu0 0.0
    %951 = vmatpush1.msra.mxu0 %v85
    %952 = vmatprep.subr.mxu0 0.0
    %953 = vmatpush1.msra.mxu0 0.0
    %954 = vmatprep.subr.mxu0 0.0
    %955 = vmatpush1.msra.mxu0 0.0
    %956 = vmatprep.subr.mxu0 0.0
    %957 = vmatpush1.msra.mxu0 0.0
    %958 = vmatprep.subr.mxu0 0.0
    %959 = vmatpush1.msra.mxu0 0.0
    %960 = vmatprep.subr.mxu0 0.0
    %961 = vmatpush1.msra.mxu0 0.0
    %962 = vmatprep.subr.mxu0 0.0
    %963 = vmatpush1.msra.mxu0 0.0
    %964 = vmatprep.subr.mxu0 0.0
    %965 = vmatpush1.msra.mxu0 0.0
    %966 = vmatprep.subr.mxu0 0.0
    %967 = vmatpush1.msra.mxu0 0.0
    %968 = vmatprep.subr.mxu0 0.0
    %969 = vmatpush1.msra.mxu0 0.0
    %970 = vmatprep.subr.mxu0 0.0
    %971 = vmatpush1.msra.mxu0 0.0
    %972 = vmatprep.subr.mxu0 0.0
    %973 = vmatpush1.msra.mxu0 0.0
    %974 = vmatprep.subr.mxu0 0.0
    %975 = vmatpush1.msra.mxu0 0.0
    %976 = vmatprep.subr.mxu0 0.0
    %977 = vmatpush1.msra.mxu0 0.0
    %978 = vmatprep.subr.mxu0 0.0
    %979 = vmatpush1.msra.mxu0 0.0
    %980 = vmatprep.subr.mxu0 0.0
    %981 = vmatpush1.msra.mxu0 0.0
    %982 = vmatprep.subr.mxu0 0.0
    %983 = vmatpush1.msra.mxu0 0.0
    %984 = vmatprep.mubr.f32.mxu0 0.0
    %985 = vmatmul.mubr.f32.gmra.mrb[0].mxu0 %v918
    %v986 = vpop.f32.mrb[0].mxu0
    %v987 = vadd.f32 %v169, %v986
    %v988 = vpop.f32.mrb[0].mxu0
    %989 = vdwg.mxu0
    %v990 = vadd.f32 %v919, %v987
    %v991 = vtanh.pop %v990
    %s992 = scalar_lea.vmem %s7, 40
    %993 = vst [vmem:[%s992] sm:$0xff] %v991
    %s994 = scalar_lea.vmem %s0, 48
    %v995 = vld [vmem:[%s994] sm:$0xff]
    %v996 = vmul.f32 %v917, 0.5
    %997 = vmatprep.subr.mxu0 0.0
    %998 = vmatpush1.msra.mxu0 %v54
    %999 = vmatprep.subr.mxu0 0.0
    %1000 = vmatpush1.msra.mxu0 %v55
    %1001 = vmatprep.subr.mxu0 0.0
    %1002 = vmatpush1.msra.mxu0 %v56
    %1003 = vmatprep.subr.mxu0 0.0
    %1004 = vmatpush1.msra.mxu0 %v57
    %1005 = vmatprep.subr.mxu0 0.0
    %1006 = vmatpush1.msra.mxu0 %v58
    %1007 = vmatprep.subr.mxu0 0.0
    %1008 = vmatpush1.msra.mxu0 %v59
    %1009 = vmatprep.subr.mxu0 0.0
    %1010 = vmatpush1.msra.mxu0 %v60
    %1011 = vmatprep.subr.mxu0 0.0
    %1012 = vmatpush1.msra.mxu0 %v61
    %1013 = vmatprep.subr.mxu0 0.0
    %1014 = vmatpush1.msra.mxu0 %v62
    %1015 = vmatprep.subr.mxu0 0.0
    %1016 = vmatpush1.msra.mxu0 %v63
    %1017 = vmatprep.subr.mxu0 0.0
    %1018 = vmatpush1.msra.mxu0 %v64
    %1019 = vmatprep.subr.mxu0 0.0
    %1020 = vmatpush1.msra.mxu0 %v65
    %1021 = vmatprep.subr.mxu0 0.0
    %1022 = vmatpush1.msra.mxu0 %v66
    %1023 = vmatprep.subr.mxu0 0.0
    %1024 = vmatpush1.msra.mxu0 %v67
    %1025 = vmatprep.subr.mxu0 0.0
    %1026 = vmatpush1.msra.mxu0 %v68
    %1027 = vmatprep.subr.mxu0 0.0
    %1028 = vmatpush1.msra.mxu0 %v69
    %1029 = vmatprep.subr.mxu0 0.0
    %1030 = vmatpush1.msra.mxu0 0.0
    %1031 = vmatprep.subr.mxu0 0.0
    %1032 = vmatpush1.msra.mxu0 0.0
    %1033 = vmatprep.subr.mxu0 0.0
    %1034 = vmatpush1.msra.mxu0 0.0
    %1035 = vmatprep.subr.mxu0 0.0
    %1036 = vmatpush1.msra.mxu0 0.0
    %1037 = vmatprep.subr.mxu0 0.0
    %1038 = vmatpush1.msra.mxu0 0.0
    %1039 = vmatprep.subr.mxu0 0.0
    %1040 = vmatpush1.msra.mxu0 0.0
    %1041 = vmatprep.subr.mxu0 0.0
    %1042 = vmatpush1.msra.mxu0 0.0
    %1043 = vmatprep.subr.mxu0 0.0
    %1044 = vmatpush1.msra.mxu0 0.0
    %1045 = vmatprep.subr.mxu0 0.0
    %1046 = vmatpush1.msra.mxu0 0.0
    %1047 = vmatprep.subr.mxu0 0.0
    %1048 = vmatpush1.msra.mxu0 0.0
    %1049 = vmatprep.subr.mxu0 0.0
    %1050 = vmatpush1.msra.mxu0 0.0
    %1051 = vmatprep.subr.mxu0 0.0
    %1052 = vmatpush1.msra.mxu0 0.0
    %1053 = vmatprep.subr.mxu0 0.0
    %1054 = vmatpush1.msra.mxu0 0.0
    %1055 = vmatprep.subr.mxu0 0.0
    %1056 = vmatpush1.msra.mxu0 0.0
    %1057 = vmatprep.subr.mxu0 0.0
    %1058 = vmatpush1.msra.mxu0 0.0
    %1059 = vmatprep.subr.mxu0 0.0
    %1060 = vmatpush1.msra.mxu0 0.0
    %1061 = vmatprep.mubr.f32.mxu0 0.0
    %1062 = vmatmul.mubr.f32.gmra.mrb[0].mxu0 %v918
    %v1063 = vpop.f32.mrb[0].mxu0
    %v1064 = vadd.f32 %v995, %v1063
    %v1065 = vpop.f32.mrb[0].mxu0
    %1066 = vdwg.mxu0
    %v1067 = vadd.f32 %v996, %v1064
    %v1068 = vtanh.pop %v1067
    %v1069 = vmul.f32 %v990, 0.75
    %1070 = vmatprep.subr.mxu0 0.0
    %1071 = vmatpush1.msra.mxu0 %v70
    %1072 = vmatprep.subr.mxu0 0.0
    %1073 = vmatpush1.msra.mxu0 %v71
    %1074 = vmatprep.subr.mxu0 0.0
    %1075 = vmatpush1.msra.mxu0 %v72
    %1076 = vmatprep.subr.mxu0 0.0
    %1077 = vmatpush1.msra.mxu0 %v73
    %1078 = vmatprep.subr.mxu0 0.0
    %1079 = vmatpush1.msra.mxu0 %v74
    %1080 = vmatprep.subr.mxu0 0.0
    %1081 = vmatpush1.msra.mxu0 %v75
    %1082 = vmatprep.subr.mxu0 0.0
    %1083 = vmatpush1.msra.mxu0 %v76
    %1084 = vmatprep.subr.mxu0 0.0
    %1085 = vmatpush1.msra.mxu0 %v77
    %1086 = vmatprep.subr.mxu0 0.0
    %1087 = vmatpush1.msra.mxu0 %v78
    %1088 = vmatprep.subr.mxu0 0.0
    %1089 = vmatpush1.msra.mxu0 %v79
    %1090 = vmatprep.subr.mxu0 0.0
    %1091 = vmatpush1.msra.mxu0 %v80
    %1092 = vmatprep.subr.mxu0 0.0
    %1093 = vmatpush1.msra.mxu0 %v81
    %1094 = vmatprep.subr.mxu0 0.0
    %1095 = vmatpush1.msra.mxu0 %v82
    %1096 = vmatprep.subr.mxu0 0.0
    %1097 = vmatpush1.msra.mxu0 %v83
    %1098 = vmatprep.subr.mxu0 0.0
    %1099 = vmatpush1.msra.mxu0 %v84
    %1100 = vmatprep.subr.mxu0 0.0
    %1101 = vmatpush1.msra.mxu0 %v85
    %1102 = vmatprep.subr.mxu0 0.0
    %1103 = vmatpush1.msra.mxu0 0.0
    %1104 = vmatprep.subr.mxu0 0.0
    %1105 = vmatpush1.msra.mxu0 0.0
    %1106 = vmatprep.subr.mxu0 0.0
    %1107 = vmatpush1.msra.mxu0 0.0
    %1108 = vmatprep.subr.mxu0 0.0
    %1109 = vmatpush1.msra.mxu0 0.0
    %1110 = vmatprep.subr.mxu0 0.0
    %1111 = vmatpush1.msra.mxu0 0.0
    %1112 = vmatprep.subr.mxu0 0.0
    %1113 = vmatpush1.msra.mxu0 0.0
    %1114 = vmatprep.subr.mxu0 0.0
    %1115 = vmatpush1.msra.mxu0 0.0
    %1116 = vmatprep.subr.mxu0 0.0
    %1117 = vmatpush1.msra.mxu0 0.0
    %1118 = vmatprep.subr.mxu0 0.0
    %1119 = vmatpush1.msra.mxu0 0.0
    %1120 = vmatprep.subr.mxu0 0.0
    %1121 = vmatpush1.msra.mxu0 0.0
    %1122 = vmatprep.subr.mxu0 0.0
    %1123 = vmatpush1.msra.mxu0 0.0
    %1124 = vmatprep.subr.mxu0 0.0
    %1125 = vmatpush1.msra.mxu0 0.0
    %1126 = vmatprep.subr.mxu0 0.0
    %1127 = vmatpush1.msra.mxu0 0.0
    %1128 = vmatprep.subr.mxu0 0.0
    %1129 = vmatpush1.msra.mxu0 0.0
    %1130 = vmatprep.subr.mxu0 0.0
    %1131 = vmatpush1.msra.mxu0 0.0
    %1132 = vmatprep.subr.mxu0 0.0
    %1133 = vmatpush1.msra.mxu0 0.0
    %1134 = vmatprep.mubr.f32.mxu0 0.0
    %1135 = vmatmul.mubr.f32.gmra.mrb[0].mxu0 %v1068
    %v1136 = vpop.f32.mrb[0].mxu0
    %v1137 = vadd.f32 %v169, %v1136
    %v1138 = vpop.f32.mrb[0].mxu0
    %1139 = vdwg.mxu0
    %v1140 = vadd.f32 %v1069, %v1137
    %v1141 = vtanh.pop %v1140
    %s1142 = scalar_lea.vmem %s7, 48
    %1143 = vst [vmem:[%s1142] sm:$0xff] %v1141
    %s1144 = scalar_lea.vmem %s0, 56
    %v1145 = vld [vmem:[%s1144] sm:$0xff]
    %v1146 = vmul.f32 %v1067, 0.5
    %1147 = vmatprep.subr.mxu0 0.0
    %1148 = vmatpush1.msra.mxu0 %v54
    %1149 = vmatprep.subr.mxu0 0.0
    %1150 = vmatpush1.msra.mxu0 %v55
    %1151 = vmatprep.subr.mxu0 0.0
    %1152 = vmatpush1.msra.mxu0 %v56
    %1153 = vmatprep.subr.mxu0 0.0
    %1154 = vmatpush1.msra.mxu0 %v57
    %1155 = vmatprep.subr.mxu0 0.0
    %1156 = vmatpush1.msra.mxu0 %v58
    %1157 = vmatprep.subr.mxu0 0.0
    %1158 = vmatpush1.msra.mxu0 %v59
    %1159 = vmatprep.subr.mxu0 0.0
    %1160 = vmatpush1.msra.mxu0 %v60
    %1161 = vmatprep.subr.mxu0 0.0
    %1162 = vmatpush1.msra.mxu0 %v61
    %1163 = vmatprep.subr.mxu0 0.0
    %1164 = vmatpush1.msra.mxu0 %v62
    %1165 = vmatprep.subr.mxu0 0.0
    %1166 = vmatpush1.msra.mxu0 %v63
    %1167 = vmatprep.subr.mxu0 0.0
    %1168 = vmatpush1.msra.mxu0 %v64
    %1169 = vmatprep.subr.mxu0 0.0
    %1170 = vmatpush1.msra.mxu0 %v65
    %1171 = vmatprep.subr.mxu0 0.0
    %1172 = vmatpush1.msra.mxu0 %v66
    %1173 = vmatprep.subr.mxu0 0.0
    %1174 = vmatpush1.msra.mxu0 %v67
    %1175 = vmatprep.subr.mxu0 0.0
    %1176 = vmatpush1.msra.mxu0 %v68
    %1177 = vmatprep.subr.mxu0 0.0
    %1178 = vmatpush1.msra.mxu0 %v69
    %1179 = vmatprep.subr.mxu0 0.0
    %1180 = vmatpush1.msra.mxu0 0.0
    %1181 = vmatprep.subr.mxu0 0.0
    %1182 = vmatpush1.msra.mxu0 0.0
    %1183 = vmatprep.subr.mxu0 0.0
    %1184 = vmatpush1.msra.mxu0 0.0
    %1185 = vmatprep.subr.mxu0 0.0
    %1186 = vmatpush1.msra.mxu0 0.0
    %1187 = vmatprep.subr.mxu0 0.0
    %1188 = vmatpush1.msra.mxu0 0.0
    %1189 = vmatprep.subr.mxu0 0.0
    %1190 = vmatpush1.msra.mxu0 0.0
    %1191 = vmatprep.subr.mxu0 0.0
    %1192 = vmatpush1.msra.mxu0 0.0
    %1193 = vmatprep.subr.mxu0 0.0
    %1194 = vmatpush1.msra.mxu0 0.0
    %1195 = vmatprep.subr.mxu0 0.0
    %1196 = vmatpush1.msra.mxu0 0.0
    %1197 = vmatprep.subr.mxu0 0.0
    %1198 = vmatpush1.msra.mxu0 0.0
    %1199 = vmatprep.subr.mxu0 0.0
    %1200 = vmatpush1.msra.mxu0 0.0
    %1201 = vmatprep.subr.mxu0 0.0
    %1202 = vmatpush1.msra.mxu0 0.0
    %1203 = vmatprep.subr.mxu0 0.0
    %1204 = vmatpush1.msra.mxu0 0.0
    %1205 = vmatprep.subr.mxu0 0.0
    %1206 = vmatpush1.msra.mxu0 0.0
    %1207 = vmatprep.subr.mxu0 0.0
    %1208 = vmatpush1.msra.mxu0 0.0
    %1209 = vmatprep.subr.mxu0 0.0
    %1210 = vmatpush1.msra.mxu0 0.0
    %1211 = vmatprep.mubr.f32.mxu0 0.0
    %1212 = vmatmul.mubr.f32.gmra.mrb[0].mxu0 %v1068
    %v1213 = vpop.f32.mrb[0].mxu0
    %v1214 = vadd.f32 %v1145, %v1213
    %v1215 = vpop.f32.mrb[0].mxu0
    %1216 = vdwg.mxu0
    %v1217 = vadd.f32 %v1146, %v1214
    %v1218 = vtanh.pop %v1217
    %v1219 = vmul.f32 %v1140, 0.75
    %1220 = vmatprep.subr.mxu0 0.0
    %1221 = vmatpush1.msra.mxu0 %v70
    %1222 = vmatprep.subr.mxu0 0.0
    %1223 = vmatpush1.msra.mxu0 %v71
    %1224 = vmatprep.subr.mxu0 0.0
    %1225 = vmatpush1.msra.mxu0 %v72
    %1226 = vmatprep.subr.mxu0 0.0
    %1227 = vmatpush1.msra.mxu0 %v73
    %1228 = vmatprep.subr.mxu0 0.0
    %1229 = vmatpush1.msra.mxu0 %v74
    %1230 = vmatprep.subr.mxu0 0.0
    %1231 = vmatpush1.msra.mxu0 %v75
    %1232 = vmatprep.subr.mxu0 0.0
    %1233 = vmatpush1.msra.mxu0 %v76
    %1234 = vmatprep.subr.mxu0 0.0
    %1235 = vmatpush1.msra.mxu0 %v77
    %1236 = vmatprep.subr.mxu0 0.0
    %1237 = vmatpush1.msra.mxu0 %v78
    %1238 = vmatprep.subr.mxu0 0.0
    %1239 = vmatpush1.msra.mxu0 %v79
    %1240 = vmatprep.subr.mxu0 0.0
    %1241 = vmatpush1.msra.mxu0 %v80
    %1242 = vmatprep.subr.mxu0 0.0
    %1243 = vmatpush1.msra.mxu0 %v81
    %1244 = vmatprep.subr.mxu0 0.0
    %1245 = vmatpush1.msra.mxu0 %v82
    %1246 = vmatprep.subr.mxu0 0.0
    %1247 = vmatpush1.msra.mxu0 %v83
    %1248 = vmatprep.subr.mxu0 0.0
    %1249 = vmatpush1.msra.mxu0 %v84
    %1250 = vmatprep.subr.mxu0 0.0
    %1251 = vmatpush1.msra.mxu0 %v85
    %1252 = vmatprep.subr.mxu0 0.0
    %1253 = vmatpush1.msra.mxu0 0.0
    %1254 = vmatprep.subr.mxu0 0.0
    %1255 = vmatpush1.msra.mxu0 0.0
    %1256 = vmatprep.subr.mxu0 0.0
    %1257 = vmatpush1.msra.mxu0 0.0
    %1258 = vmatprep.subr.mxu0 0.0
    %1259 = vmatpush1.msra.mxu0 0.0
    %1260 = vmatprep.subr.mxu0 0.0
    %1261 = vmatpush1.msra.mxu0 0.0
    %1262 = vmatprep.subr.mxu0 0.0
    %1263 = vmatpush1.msra.mxu0 0.0
    %1264 = vmatprep.subr.mxu0 0.0
    %1265 = vmatpush1.msra.mxu0 0.0
    %1266 = vmatprep.subr.mxu0 0.0
    %1267 = vmatpush1.msra.mxu0 0.0
    %1268 = vmatprep.subr.mxu0 0.0
    %1269 = vmatpush1.msra.mxu0 0.0
    %1270 = vmatprep.subr.mxu0 0.0
    %1271 = vmatpush1.msra.mxu0 0.0
    %1272 = vmatprep.subr.mxu0 0.0
    %1273 = vmatpush1.msra.mxu0 0.0
    %1274 = vmatprep.subr.mxu0 0.0
    %1275 = vmatpush1.msra.mxu0 0.0
    %1276 = vmatprep.subr.mxu0 0.0
    %1277 = vmatpush1.msra.mxu0 0.0
    %1278 = vmatprep.subr.mxu0 0.0
    %1279 = vmatpush1.msra.mxu0 0.0
    %1280 = vmatprep.subr.mxu0 0.0
    %1281 = vmatpush1.msra.mxu0 0.0
    %1282 = vmatprep.subr.mxu0 0.0
    %1283 = vmatpush1.msra.mxu0 0.0
    %1284 = vmatprep.mubr.f32.mxu0 0.0
    %1285 = vmatmul.mubr.f32.gmra.mrb[0].mxu0 %v1218
    %v1286 = vpop.f32.mrb[0].mxu0
    %v1287 = vadd.f32 %v169, %v1286
    %v1288 = vpop.f32.mrb[0].mxu0
    %1289 = vdwg.mxu0
    %v1290 = vadd.f32 %v1219, %v1287
    %v1291 = vtanh.pop %v1290
    %s1292 = scalar_lea.vmem %s7, 56
    %1293 = vst [vmem:[%s1292] sm:$0xff] %v1291
    %1294 = vst [vmem:[%s8] sm:$0xff] %v1217
    %1295 = vst [vmem:[%s9] sm:$0xff] %v1218
    %1296 = vst [vmem:[%s10] sm:$0xff] %v1290
    // Predicated region
    $region38: #{_dm_echo1_seq_impl.1} parent=1 // pred_check
      _
    $region39: #{_dm_echo1_seq_impl.1} parent=1 // pred_check_branch
      %1298 = sbr.rel (0) target = $region41
    $region40: #{_dm_echo1_seq_impl.1} parent=1 // pred_region
      _
    $region41: #{_dm_echo1_seq_impl.1} parent=1 // pred_fallthru
      _
    // Predicated region
    $region42: #{_dm_echo1_seq_impl.1} parent=1 // pred_check
      _
    $region43: #{_dm_echo1_seq_impl.1} parent=1 // pred_check_branch
      %1300 = sbr.rel (0) target = $region45
    $region44: #{_dm_echo1_seq_impl.1} parent=1 // pred_region
      _
    $region45: #{_dm_echo1_seq_impl.1} parent=1 // pred_fallthru
      _
    // Predicated region
    $region46: #{_dm_echo1_seq_impl.1} parent=1 // pred_check
      _
    $region47: #{_dm_echo1_seq_impl.1} parent=1 // pred_check_branch
      %1302 = sbr.rel (0) target = $region49
    $region48: #{_dm_echo1_seq_impl.1} parent=1 // pred_region
      _
    $region49: #{_dm_echo1_seq_impl.1} parent=1 // pred_fallthru
      _
    // Predicated region
    $region50: #{_dm_echo1_seq_impl.1} parent=1 // pred_check
      _
    $region51: #{_dm_echo1_seq_impl.1} parent=1 // pred_check_branch
      %1304 = sbr.rel (0) target = $region53
    $region52: #{_dm_echo1_seq_impl.1} parent=1 // pred_region
      _
    $region53: #{_dm_echo1_seq_impl.1} parent=1 // pred_fallthru
      _
    // Predicated region
    $region54: #{_dm_echo1_seq_impl.1} parent=1 // pred_check
      _
    $region55: #{_dm_echo1_seq_impl.1} parent=1 // pred_check_branch
      %1306 = sbr.rel (0) target = $region57
    $region56: #{_dm_echo1_seq_impl.1} parent=1 // pred_region
      _
    $region57: #{_dm_echo1_seq_impl.1} parent=1 // pred_fallthru
      _
    // Predicated region
    $region58: #{_dm_echo1_seq_impl.1} parent=1 // pred_check
      _
    $region59: #{_dm_echo1_seq_impl.1} parent=1 // pred_check_branch
      %1308 = sbr.rel (0) target = $region61
    $region60: #{_dm_echo1_seq_impl.1} parent=1 // pred_region
      _
    $region61: #{_dm_echo1_seq_impl.1} parent=1 // pred_fallthru
      _
    // Predicated region
    $region62: #{_dm_echo1_seq_impl.1} parent=1 // pred_check
      _
    $region63: #{_dm_echo1_seq_impl.1} parent=1 // pred_check_branch
      %1310 = sbr.rel (0) target = $region65
    $region64: #{_dm_echo1_seq_impl.1} parent=1 // pred_region
      _
    $region65: #{_dm_echo1_seq_impl.1} parent=1 // pred_fallthru
      _
    // Predicated region
    $region66: #{_dm_echo1_seq_impl.1} parent=1 // pred_check
      _
    $region67: #{_dm_echo1_seq_impl.1} parent=1 // pred_check_branch
      %1312 = sbr.rel (0) target = $region69
    $region68: #{_dm_echo1_seq_impl.1} parent=1 // pred_region
      _
    $region69: #{_dm_echo1_seq_impl.1} parent=1 // pred_fallthru
      _
    %1313 = vsyncpa [#allocation3], 1

</llo_original>
